<compile_context>
chip_gen: v6e
topology: v6e:2x2x1
jax: 0.10.0
libtpu: 0.0.40
codegen_flags: <defaults>
</compile_context>

<pallas_src>
import jax
import jax.numpy as jnp
from jax.experimental import pallas as pl
from jax.experimental.pallas import tpu as pltpu

IN_SIZE = 5
HID_SIZE = 256
OUT_SIZE = 5
ROB_PAD = 128   # lane-dense padded width of the robot output
XPAD = 8        # sublane-padded width of the raw input / first-layer x weight


def _autoencoder_kernel(
    x_ref,       # (1, B, 8)  f32  timestep t input, columns >= IN_SIZE are zero
    h0_ref,      # (B, 256)   f32  initial hidden state (used at t == 0)
    w1x_ref,     # (8, 256)   f32  encoder layer-1 x-part (rows >= IN_SIZE zero)
    wm_ref,      # (6, 256, 256) bf16: [W1h, ew2, ew3, rw2, hw2, hw3]
    wdec1_ref,   # (256, 512) bf16: [rw1 | hw1]  (fused decoder first layers)
    wrob3_ref,   # (256, 128) bf16: rw3 zero-padded to lane width
    bm_ref,      # (8, 256)   f32: [eb1, eb2, eb3, rb2, hb2, hb3, rb3_pad, 0]
    bdec1_ref,   # (1, 512)   f32: [rb1 | hb1]
    robot_ref,   # (1, B, 128) f32 (lane-dense; wrapper slices to OUT_SIZE)
    old_h_ref,   # (1, B, 256) f32 encoder output at step t
    new_h_ref,   # (1, B, 256) f32 decoder hidden output at step t
    h_carry,     # (B, 256)   f32 VMEM scratch: hidden state carried across t
):
    t = pl.program_id(0)

    @pl.when(t == 0)
    def _():
        h_carry[...] = h0_ref[...]

    def mm(a_f32, w_bf16):
        # bf16 MXU inputs, f32 accumulation.
        return jnp.dot(a_f32.astype(jnp.bfloat16), w_bf16,
                       preferred_element_type=jnp.float32)

    x = x_ref[0]            # (B, 8)
    h_prev = h_carry[...]   # (B, 256)

    # --- Encoder: Linear -> ReLU -> Linear -> ReLU -> Linear ---
    # Torch layer 1 is Linear(261, 256) on concat(x, hidden).  The hidden part
    # goes to the MXU; the 5-wide x part is 8 cheap VPU outer-product FMAs
    # (avoids a K=256 multiply-by-zero MXU pass and an all-zero weight slab).
    acc = mm(h_prev, wm_ref[0]) + bm_ref[0:1, :]
    for i in range(XPAD):
        acc = acc + x[:, i:i + 1] * w1x_ref[i:i + 1, :]
    h = jnp.maximum(acc, 0.0)
    h = jnp.maximum(mm(h, wm_ref[1]) + bm_ref[1:2, :], 0.0)
    enc = mm(h, wm_ref[2]) + bm_ref[2:3, :]
    # Encoder.forward stores its output as hidden_state, so the `old_hidden`
    # observed by Autoencoder.forward equals the encoder output.
    old_h_ref[0] = enc

    # --- Decoder: fused first layers of get_robot / get_hidden_state ---
    d1 = jnp.maximum(mm(enc, wdec1_ref[...]) + bdec1_ref[...], 0.0)  # (B, 512)
    r = d1[:, :HID_SIZE]
    g = d1[:, HID_SIZE:]

    # --- Decoder.get_robot (remaining layers) ---
    r = jnp.maximum(mm(r, wm_ref[3]) + bm_ref[3:4, :], 0.0)
    robot_ref[0] = mm(r, wrob3_ref[...]) + bm_ref[6:7, :ROB_PAD]

    # --- Decoder.get_hidden_state (remaining layers) ---
    g = jnp.maximum(mm(g, wm_ref[4]) + bm_ref[4:5, :], 0.0)
    new_h = mm(g, wm_ref[5]) + bm_ref[5:6, :]
    new_h_ref[0] = new_h
    h_carry[...] = new_h      # carry to next timestep (read-before-write above)


def init_params(key):
    """Torch-like per-layer init: U(-1/sqrt(fan_in), +1/sqrt(fan_in))."""
    layer_shapes = [
        (IN_SIZE + HID_SIZE, HID_SIZE),   # encoder layer 1
        (HID_SIZE, HID_SIZE),             # encoder layer 2
        (HID_SIZE, HID_SIZE),             # encoder layer 3
        (HID_SIZE, HID_SIZE),             # get_robot layer 1
        (HID_SIZE, HID_SIZE),             # get_robot layer 2
        (HID_SIZE, OUT_SIZE),             # get_robot layer 3
        (HID_SIZE, HID_SIZE),             # get_hidden_state layer 1
        (HID_SIZE, HID_SIZE),             # get_hidden_state layer 2
        (HID_SIZE, HID_SIZE),             # get_hidden_state layer 3
    ]
    keys = jax.random.split(key, 2 * len(layer_shapes))
    params = []
    for i, (fan_in, fan_out) in enumerate(layer_shapes):
        bound = 1.0 / (float(fan_in) ** 0.5)
        w = jax.random.uniform(keys[2 * i], (fan_in, fan_out), jnp.float32,
                               -bound, bound)
        b = jax.random.uniform(keys[2 * i + 1], (1, fan_out), jnp.float32,
                               -bound, bound)
        params.append((w, b))
    return params


def pack_params(params):
    """Coalesce the 18 tensors into 6 packed arrays (main weights in bf16)."""
    ((ew1, eb1), (ew2, eb2), (ew3, eb3),
     (rw1, rb1), (rw2, rb2), (rw3, rb3),
     (hw1, hb1), (hw2, hb2), (hw3, hb3)) = params

    # Tiny (8,256) f32 x-part of encoder layer 1 (consumed on the VPU).
    w1x = jnp.zeros((XPAD, HID_SIZE), jnp.float32).at[:IN_SIZE].set(ew1[:IN_SIZE])
    w1h = ew1[IN_SIZE:]
    w_main = jnp.stack([w1h, ew2, ew3, rw2, hw2, hw3]).astype(jnp.bfloat16)  # (6,256,256)
    w_dec1 = jnp.concatenate([rw1, hw1], axis=1).astype(jnp.bfloat16)        # (256,512)
    w_rob3 = (jnp.zeros((HID_SIZE, ROB_PAD), jnp.float32)
              .at[:, :OUT_SIZE].set(rw3).astype(jnp.bfloat16))               # (256,128)

    rb3_pad = jnp.zeros((1, HID_SIZE), jnp.float32).at[:, :OUT_SIZE].set(rb3)
    b_main = jnp.concatenate(
        [eb1, eb2, eb3, rb2, hb2, hb3, rb3_pad,
         jnp.zeros((1, HID_SIZE), jnp.float32)], axis=0)                     # (8,256)
    b_dec1 = jnp.concatenate([rb1, hb1], axis=1)                             # (1,512)
    return (w1x, w_main, w_dec1, w_rob3, b_main, b_dec1)


@jax.jit
def autoencoder_forward_seq(x_seq, hidden0, packed):
    """Run the recurrent Autoencoder over a whole sequence in one pallas_call.

    x_seq: (T, B, IN_SIZE) f32, hidden0: (B, HID_SIZE) f32.
    Returns (robot (T,B,OUT_SIZE), old_hidden (T,B,HID), new_hidden (T,B,HID)).
    T=1, B=1 reproduces a single torch `Autoencoder.forward` call.
    """
    w1x, w_main, w_dec1, w_rob3, b_main, b_dec1 = packed
    T, B, _ = x_seq.shape
    # Sublane-pad x to 8 columns (only 256 B/step of input DMA at B=8).
    x_pad = jnp.zeros((T, B, XPAD), jnp.float32).at[:, :, :IN_SIZE].set(x_seq)

    step3 = lambda t: (t, 0, 0)    # per-timestep blocks
    const2 = lambda t: (0, 0)      # resident blocks (DMA'd once, reused every t)
    const3 = lambda t: (0, 0, 0)

    grid_spec = pltpu.PrefetchScalarGridSpec(
        num_scalar_prefetch=0,
        grid=(T,),
        in_specs=[
            pl.BlockSpec((1, B, XPAD), step3),                 # x (per step)
            pl.BlockSpec((B, HID_SIZE), const2),               # hidden0
            pl.BlockSpec((XPAD, HID_SIZE), const2),            # w1x
            pl.BlockSpec((6, HID_SIZE, HID_SIZE), const3),     # w_main
            pl.BlockSpec((HID_SIZE, 2 * HID_SIZE), const2),    # w_dec1
            pl.BlockSpec((HID_SIZE, ROB_PAD), const2),         # w_rob3
            pl.BlockSpec((8, HID_SIZE), const2),               # b_main
            pl.BlockSpec((1, 2 * HID_SIZE), const2),           # b_dec1
        ],
        out_specs=(
            pl.BlockSpec((1, B, ROB_PAD), step3),              # robot (lane-dense)
            pl.BlockSpec((1, B, HID_SIZE), step3),             # old_hidden
            pl.BlockSpec((1, B, HID_SIZE), step3),             # new_hidden
        ),
        scratch_shapes=[pltpu.VMEM((B, HID_SIZE), jnp.float32)],  # hidden carry
    )

    robot_pad, old_hidden, new_hidden = pl.pallas_call(
        _autoencoder_kernel,
        out_shape=(
            jax.ShapeDtypeStruct((T, B, ROB_PAD), jnp.float32),
            jax.ShapeDtypeStruct((T, B, HID_SIZE), jnp.float32),
            jax.ShapeDtypeStruct((T, B, HID_SIZE), jnp.float32),
        ),
        grid_spec=grid_spec,
        compiler_params=pltpu.CompilerParams(
            dimension_semantics=("arbitrary",)),   # timesteps are sequential
    )(x_pad, hidden0, w1x, w_main, w_dec1, w_rob3, b_main, b_dec1)

    return robot_pad[:, :, :OUT_SIZE], old_hidden, new_hidden


def reference_forward_seq(x_seq, hidden0, params):
    """Pure-JAX reference recurrence with the same precision scheme as the kernel
    (bf16 weights / f32 MXU accumulate; f32 x-part of encoder layer 1)."""
    ((ew1, eb1), (ew2, eb2), (ew3, eb3),
     (rw1, rb1), (rw2, rb2), (rw3, rb3),
     (hw1, hb1), (hw2, hb2), (hw3, hb3)) = params

    def dense(a, w, b, relu):
        y = jnp.dot(a.astype(jnp.bfloat16), w.astype(jnp.bfloat16),
                    preferred_element_type=jnp.float32) + b
        return jnp.maximum(y, 0.0) if relu else y

    w1x = ew1[:IN_SIZE]
    w1h = ew1[IN_SIZE:]

    robots, old_hs, new_hs = [], [], []
    h = hidden0
    for t in range(x_seq.shape[0]):
        x = x_seq[t]
        a = (jnp.dot(x, w1x, precision=jax.lax.Precision.HIGHEST)
             + jnp.dot(h.astype(jnp.bfloat16), w1h.astype(jnp.bfloat16),
                       preferred_element_type=jnp.float32) + eb1)
        hh = jnp.maximum(a, 0.0)
        hh = dense(hh, ew2, eb2, True)
        enc = dense(hh, ew3, eb3, False)
        old_hidden = enc
        r = dense(enc, rw1, rb1, True)
        r = dense(r, rw2, rb2, True)
        robot = dense(r, rw3, rb3, False)
        g = dense(enc, hw1, hb1, True)
        g = dense(g, hw2, hb2, True)
        new_hidden = dense(g, hw3, hb3, False)
        robots.append(robot)
        old_hs.append(old_hidden)
        new_hs.append(new_hidden)
        h = new_hidden
    return jnp.stack(robots), jnp.stack(old_hs), jnp.stack(new_hs)


if __name__ == "__main__":
    key = jax.random.PRNGKey(0)
    pkey, xkey = jax.random.split(key)
    params = init_params(pkey)
    packed = pack_params(params)

    T, B = 4, 8  # small demo: 4 recurrent timesteps, 8 independent rows
    x_seq = jax.random.normal(xkey, (T, B, IN_SIZE), jnp.float32)
    hidden0 = jnp.zeros((B, HID_SIZE), jnp.float32)   # Encoder.reset_hidden_state

    robot, old_h, new_h = autoencoder_forward_seq(x_seq, hidden0, packed)
    jax.block_until_ready((robot, old_h, new_h))

    r_ref, oh_ref, nh_ref = reference_forward_seq(x_seq, hidden0, params)

    assert robot.shape == (T, B, OUT_SIZE)
    assert old_h.shape == (T, B, HID_SIZE)
    assert new_h.shape == (T, B, HID_SIZE)

    tol = dict(atol=5e-3, rtol=5e-3)
    assert jnp.allclose(robot, r_ref, **tol)
    assert jnp.allclose(old_h, oh_ref, **tol)
    assert jnp.allclose(new_h, nh_ref, **tol)

    print("KERNEL_OK")
</pallas_src>

<mosaic_0001>
module attributes {stable_mosaic.version = 11 : i64} {
  func.func @_autoencoder_kernel(%arg0: i32, %arg1: memref<1x8x8xf32, #tpu.memory_space<vmem>>, %arg2: memref<8x256xf32, #tpu.memory_space<vmem>>, %arg3: memref<8x256xf32, #tpu.memory_space<vmem>>, %arg4: memref<6x256x256xbf16, #tpu.memory_space<vmem>>, %arg5: memref<256x512xbf16, #tpu.memory_space<vmem>>, %arg6: memref<256x128xbf16, #tpu.memory_space<vmem>>, %arg7: memref<8x256xf32, #tpu.memory_space<vmem>>, %arg8: memref<1x512xf32, #tpu.memory_space<vmem>>, %arg9: memref<1x8x128xf32, #tpu.memory_space<vmem>>, %arg10: memref<1x8x256xf32, #tpu.memory_space<vmem>>, %arg11: memref<1x8x256xf32, #tpu.memory_space<vmem>>, %arg12: memref<8x256xf32, #tpu.memory_space<vmem>>) attributes {dimension_semantics = [#tpu.dimension_semantics<arbitrary>], iteration_bounds = array<i64: 4>, scalar_prefetch = 0 : i64, scratch_operands = 1 : i64, tpu.core_type = #tpu.core_type<tc>, window_params = [{transform_indices = @transform_0, window_bounds = array<i64: 1, 8, 8>}, {pipeline_mode = #tpu.pipeline_mode<synchronous>, transform_indices = @transform_1, window_bounds = array<i64: 8, 256>}, {pipeline_mode = #tpu.pipeline_mode<synchronous>, transform_indices = @transform_2, window_bounds = array<i64: 8, 256>}, {pipeline_mode = #tpu.pipeline_mode<synchronous>, transform_indices = @transform_3, window_bounds = array<i64: 6, 256, 256>}, {pipeline_mode = #tpu.pipeline_mode<synchronous>, transform_indices = @transform_4, window_bounds = array<i64: 256, 512>}, {pipeline_mode = #tpu.pipeline_mode<synchronous>, transform_indices = @transform_5, window_bounds = array<i64: 256, 128>}, {pipeline_mode = #tpu.pipeline_mode<synchronous>, transform_indices = @transform_6, window_bounds = array<i64: 8, 256>}, {pipeline_mode = #tpu.pipeline_mode<synchronous>, transform_indices = @transform_7, window_bounds = array<i64: 1, 512>}, {transform_indices = @transform_8, window_bounds = array<i64: 1, 8, 128>}, {transform_indices = @transform_9, window_bounds = array<i64: 1, 8, 256>}, {transform_indices = @transform_10, window_bounds = array<i64: 1, 8, 256>}]} {
    %c0_i32 = arith.constant 0 : i32
    %0 = arith.cmpi eq, %arg0, %c0_i32 : i32
    %1 = arith.extui %0 : i1 to i32
    %c0_i32_0 = arith.constant 0 : i32
    %2 = arith.cmpi ne, %1, %c0_i32_0 : i32
    scf.if %2 {
      %c0_75 = arith.constant 0 : index
      %c0_76 = arith.constant 0 : index
      %130 = vector.load %arg2[%c0_75, %c0_76] : memref<8x256xf32, #tpu.memory_space<vmem>>, vector<8x256xf32>
      %c0_77 = arith.constant 0 : index
      %c0_78 = arith.constant 0 : index
      %131 = vector.load %arg12[%c0_77, %c0_78] : memref<8x256xf32, #tpu.memory_space<vmem>>, vector<8x256xf32>
      tpu.vector_store %arg12[%c0_77, %c0_78], %130 {strides = array<i32>} : memref<8x256xf32, #tpu.memory_space<vmem>>, vector<8x256xf32>,
    } else {
    }
    %c0 = arith.constant 0 : index
    %c0_1 = arith.constant 0 : index
    %c0_2 = arith.constant 0 : index
    %3 = vector.load %arg1[%c0, %c0_1, %c0_2] : memref<1x8x8xf32, #tpu.memory_space<vmem>>, vector<1x8x8xf32>
    %4 = vector.shape_cast %3 : vector<1x8x8xf32> to vector<8x8xf32>
    %c0_3 = arith.constant 0 : index
    %c0_4 = arith.constant 0 : index
    %5 = vector.load %arg12[%c0_3, %c0_4] : memref<8x256xf32, #tpu.memory_space<vmem>>, vector<8x256xf32>
    %c0_5 = arith.constant 0 : index
    %c0_6 = arith.constant 0 : index
    %c0_7 = arith.constant 0 : index
    %6 = vector.load %arg4[%c0_5, %c0_6, %c0_7] : memref<6x256x256xbf16, #tpu.memory_space<vmem>>, vector<1x256x256xbf16>
    %7 = vector.shape_cast %6 : vector<1x256x256xbf16> to vector<256x256xbf16>
    %8 = arith.truncf %5 : vector<8x256xf32> to vector<8x256xbf16>
    %cst = arith.constant dense<0.000000e+00> : vector<8x256xf32>
    %9 = tpu.matmul %8, %7, %cst {dimension_numbers = #tpu.dot_dimension_numbers<[1], [0], [0], [1], [0, 0, 1, 1], [], []>} : vector<8x256xbf16>, vector<256x256xbf16>, vector<8x256xf32> -> vector<8x256xf32>
    %c0_8 = arith.constant 0 : index
    %c0_9 = arith.constant 0 : index
    %10 = vector.load %arg7[%c0_8, %c0_9] : memref<8x256xf32, #tpu.memory_space<vmem>>, vector<1x256xf32>
    %11 = vector.broadcast %10 : vector<1x256xf32> to vector<8x256xf32>
    %12 = arith.addf %9, %11 : vector<8x256xf32>
    %13 = vector.extract_strided_slice %4 {offsets = [0, 0], sizes = [8, 1], strides = [1, 1]} : vector<8x8xf32> to vector<8x1xf32>
    %c0_10 = arith.constant 0 : index
    %c0_11 = arith.constant 0 : index
    %14 = vector.load %arg3[%c0_10, %c0_11] : memref<8x256xf32, #tpu.memory_space<vmem>>, vector<1x256xf32>
    %15 = vector.broadcast %13 : vector<8x1xf32> to vector<8x256xf32>
    %16 = vector.broadcast %14 : vector<1x256xf32> to vector<8x256xf32>
    %17 = arith.mulf %15, %16 : vector<8x256xf32>
    %18 = arith.addf %12, %17 : vector<8x256xf32>
    %19 = vector.extract_strided_slice %4 {offsets = [0, 1], sizes = [8, 1], strides = [1, 1]} : vector<8x8xf32> to vector<8x1xf32>
    %c1 = arith.constant 1 : index
    %c0_12 = arith.constant 0 : index
    %20 = vector.load %arg3[%c1, %c0_12] : memref<8x256xf32, #tpu.memory_space<vmem>>, vector<1x256xf32>
    %21 = vector.broadcast %19 : vector<8x1xf32> to vector<8x256xf32>
    %22 = vector.broadcast %20 : vector<1x256xf32> to vector<8x256xf32>
    %23 = arith.mulf %21, %22 : vector<8x256xf32>
    %24 = arith.addf %18, %23 : vector<8x256xf32>
    %25 = vector.extract_strided_slice %4 {offsets = [0, 2], sizes = [8, 1], strides = [1, 1]} : vector<8x8xf32> to vector<8x1xf32>
    %c2 = arith.constant 2 : index
    %c0_13 = arith.constant 0 : index
    %26 = vector.load %arg3[%c2, %c0_13] : memref<8x256xf32, #tpu.memory_space<vmem>>, vector<1x256xf32>
    %27 = vector.broadcast %25 : vector<8x1xf32> to vector<8x256xf32>
    %28 = vector.broadcast %26 : vector<1x256xf32> to vector<8x256xf32>
    %29 = arith.mulf %27, %28 : vector<8x256xf32>
    %30 = arith.addf %24, %29 : vector<8x256xf32>
    %31 = vector.extract_strided_slice %4 {offsets = [0, 3], sizes = [8, 1], strides = [1, 1]} : vector<8x8xf32> to vector<8x1xf32>
    %c3 = arith.constant 3 : index
    %c0_14 = arith.constant 0 : index
    %32 = vector.load %arg3[%c3, %c0_14] : memref<8x256xf32, #tpu.memory_space<vmem>>, vector<1x256xf32>
    %33 = vector.broadcast %31 : vector<8x1xf32> to vector<8x256xf32>
    %34 = vector.broadcast %32 : vector<1x256xf32> to vector<8x256xf32>
    %35 = arith.mulf %33, %34 : vector<8x256xf32>
    %36 = arith.addf %30, %35 : vector<8x256xf32>
    %37 = vector.extract_strided_slice %4 {offsets = [0, 4], sizes = [8, 1], strides = [1, 1]} : vector<8x8xf32> to vector<8x1xf32>
    %c4 = arith.constant 4 : index
    %c0_15 = arith.constant 0 : index
    %38 = vector.load %arg3[%c4, %c0_15] : memref<8x256xf32, #tpu.memory_space<vmem>>, vector<1x256xf32>
    %39 = vector.broadcast %37 : vector<8x1xf32> to vector<8x256xf32>
    %40 = vector.broadcast %38 : vector<1x256xf32> to vector<8x256xf32>
    %41 = arith.mulf %39, %40 : vector<8x256xf32>
    %42 = arith.addf %36, %41 : vector<8x256xf32>
    %43 = vector.extract_strided_slice %4 {offsets = [0, 5], sizes = [8, 1], strides = [1, 1]} : vector<8x8xf32> to vector<8x1xf32>
    %c5 = arith.constant 5 : index
    %c0_16 = arith.constant 0 : index
    %44 = vector.load %arg3[%c5, %c0_16] : memref<8x256xf32, #tpu.memory_space<vmem>>, vector<1x256xf32>
    %45 = vector.broadcast %43 : vector<8x1xf32> to vector<8x256xf32>
    %46 = vector.broadcast %44 : vector<1x256xf32> to vector<8x256xf32>
    %47 = arith.mulf %45, %46 : vector<8x256xf32>
    %48 = arith.addf %42, %47 : vector<8x256xf32>
    %49 = vector.extract_strided_slice %4 {offsets = [0, 6], sizes = [8, 1], strides = [1, 1]} : vector<8x8xf32> to vector<8x1xf32>
    %c6 = arith.constant 6 : index
    %c0_17 = arith.constant 0 : index
    %50 = vector.load %arg3[%c6, %c0_17] : memref<8x256xf32, #tpu.memory_space<vmem>>, vector<1x256xf32>
    %51 = vector.broadcast %49 : vector<8x1xf32> to vector<8x256xf32>
    %52 = vector.broadcast %50 : vector<1x256xf32> to vector<8x256xf32>
    %53 = arith.mulf %51, %52 : vector<8x256xf32>
    %54 = arith.addf %48, %53 : vector<8x256xf32>
    %55 = vector.extract_strided_slice %4 {offsets = [0, 7], sizes = [8, 1], strides = [1, 1]} : vector<8x8xf32> to vector<8x1xf32>
    %c7 = arith.constant 7 : index
    %c0_18 = arith.constant 0 : index
    %56 = vector.load %arg3[%c7, %c0_18] : memref<8x256xf32, #tpu.memory_space<vmem>>, vector<1x256xf32>
    %57 = vector.broadcast %55 : vector<8x1xf32> to vector<8x256xf32>
    %58 = vector.broadcast %56 : vector<1x256xf32> to vector<8x256xf32>
    %59 = arith.mulf %57, %58 : vector<8x256xf32>
    %60 = arith.addf %54, %59 : vector<8x256xf32>
    %cst_19 = arith.constant 0.000000e+00 : f32
    %61 = vector.broadcast %cst_19 : f32 to vector<8x256xf32>
    %62 = arith.maximumf %60, %61 : vector<8x256xf32>
    %c1_20 = arith.constant 1 : index
    %c0_21 = arith.constant 0 : index
    %c0_22 = arith.constant 0 : index
    %63 = vector.load %arg4[%c1_20, %c0_21, %c0_22] : memref<6x256x256xbf16, #tpu.memory_space<vmem>>, vector<1x256x256xbf16>
    %64 = vector.shape_cast %63 : vector<1x256x256xbf16> to vector<256x256xbf16>
    %65 = arith.truncf %62 : vector<8x256xf32> to vector<8x256xbf16>
    %cst_23 = arith.constant dense<0.000000e+00> : vector<8x256xf32>
    %66 = tpu.matmul %65, %64, %cst_23 {dimension_numbers = #tpu.dot_dimension_numbers<[1], [0], [0], [1], [0, 0, 1, 1], [], []>} : vector<8x256xbf16>, vector<256x256xbf16>, vector<8x256xf32> -> vector<8x256xf32>
    %c1_24 = arith.constant 1 : index
    %c0_25 = arith.constant 0 : index
    %67 = vector.load %arg7[%c1_24, %c0_25] : memref<8x256xf32, #tpu.memory_space<vmem>>, vector<1x256xf32>
    %68 = vector.broadcast %67 : vector<1x256xf32> to vector<8x256xf32>
    %69 = arith.addf %66, %68 : vector<8x256xf32>
    %cst_26 = arith.constant 0.000000e+00 : f32
    %70 = vector.broadcast %cst_26 : f32 to vector<8x256xf32>
    %71 = arith.maximumf %69, %70 : vector<8x256xf32>
    %c2_27 = arith.constant 2 : index
    %c0_28 = arith.constant 0 : index
    %c0_29 = arith.constant 0 : index
    %72 = vector.load %arg4[%c2_27, %c0_28, %c0_29] : memref<6x256x256xbf16, #tpu.memory_space<vmem>>, vector<1x256x256xbf16>
    %73 = vector.shape_cast %72 : vector<1x256x256xbf16> to vector<256x256xbf16>
    %74 = arith.truncf %71 : vector<8x256xf32> to vector<8x256xbf16>
    %cst_30 = arith.constant dense<0.000000e+00> : vector<8x256xf32>
    %75 = tpu.matmul %74, %73, %cst_30 {dimension_numbers = #tpu.dot_dimension_numbers<[1], [0], [0], [1], [0, 0, 1, 1], [], []>} : vector<8x256xbf16>, vector<256x256xbf16>, vector<8x256xf32> -> vector<8x256xf32>
    %c2_31 = arith.constant 2 : index
    %c0_32 = arith.constant 0 : index
    %76 = vector.load %arg7[%c2_31, %c0_32] : memref<8x256xf32, #tpu.memory_space<vmem>>, vector<1x256xf32>
    %77 = vector.broadcast %76 : vector<1x256xf32> to vector<8x256xf32>
    %78 = arith.addf %75, %77 : vector<8x256xf32>
    %c0_33 = arith.constant 0 : index
    %c0_34 = arith.constant 0 : index
    %c0_35 = arith.constant 0 : index
    %79 = vector.load %arg10[%c0_33, %c0_34, %c0_35] : memref<1x8x256xf32, #tpu.memory_space<vmem>>, vector<1x8x256xf32>
    %80 = vector.shape_cast %79 : vector<1x8x256xf32> to vector<8x256xf32>
    %81 = vector.shape_cast %78 : vector<8x256xf32> to vector<1x8x256xf32>
    tpu.vector_store %arg10[%c0_33, %c0_34, %c0_35], %81 {strides = array<i32>} : memref<1x8x256xf32, #tpu.memory_space<vmem>>, vector<1x8x256xf32>,
    %c0_36 = arith.constant 0 : index
    %c0_37 = arith.constant 0 : index
    %82 = vector.load %arg5[%c0_36, %c0_37] : memref<256x512xbf16, #tpu.memory_space<vmem>>, vector<256x512xbf16>
    %83 = arith.truncf %78 : vector<8x256xf32> to vector<8x256xbf16>
    %cst_38 = arith.constant dense<0.000000e+00> : vector<8x512xf32>
    %84 = tpu.matmul %83, %82, %cst_38 {dimension_numbers = #tpu.dot_dimension_numbers<[1], [0], [0], [1], [0, 0, 1, 1], [], []>} : vector<8x256xbf16>, vector<256x512xbf16>, vector<8x512xf32> -> vector<8x512xf32>
    %c0_39 = arith.constant 0 : index
    %c0_40 = arith.constant 0 : index
    %85 = vector.load %arg8[%c0_39, %c0_40] : memref<1x512xf32, #tpu.memory_space<vmem>>, vector<1x512xf32>
    %86 = vector.broadcast %85 : vector<1x512xf32> to vector<8x512xf32>
    %87 = arith.addf %84, %86 : vector<8x512xf32>
    %cst_41 = arith.constant 0.000000e+00 : f32
    %88 = vector.broadcast %cst_41 : f32 to vector<8x512xf32>
    %89 = arith.maximumf %87, %88 : vector<8x512xf32>
    %90 = vector.extract_strided_slice %89 {offsets = [0, 0], sizes = [8, 256], strides = [1, 1]} : vector<8x512xf32> to vector<8x256xf32>
    %91 = vector.extract_strided_slice %89 {offsets = [0, 256], sizes = [8, 256], strides = [1, 1]} : vector<8x512xf32> to vector<8x256xf32>
    %c3_42 = arith.constant 3 : index
    %c0_43 = arith.constant 0 : index
    %c0_44 = arith.constant 0 : index
    %92 = vector.load %arg4[%c3_42, %c0_43, %c0_44] : memref<6x256x256xbf16, #tpu.memory_space<vmem>>, vector<1x256x256xbf16>
    %93 = vector.shape_cast %92 : vector<1x256x256xbf16> to vector<256x256xbf16>
    %94 = arith.truncf %90 : vector<8x256xf32> to vector<8x256xbf16>
    %cst_45 = arith.constant dense<0.000000e+00> : vector<8x256xf32>
    %95 = tpu.matmul %94, %93, %cst_45 {dimension_numbers = #tpu.dot_dimension_numbers<[1], [0], [0], [1], [0, 0, 1, 1], [], []>} : vector<8x256xbf16>, vector<256x256xbf16>, vector<8x256xf32> -> vector<8x256xf32>
    %c3_46 = arith.constant 3 : index
    %c0_47 = arith.constant 0 : index
    %96 = vector.load %arg7[%c3_46, %c0_47] : memref<8x256xf32, #tpu.memory_space<vmem>>, vector<1x256xf32>
    %97 = vector.broadcast %96 : vector<1x256xf32> to vector<8x256xf32>
    %98 = arith.addf %95, %97 : vector<8x256xf32>
    %cst_48 = arith.constant 0.000000e+00 : f32
    %99 = vector.broadcast %cst_48 : f32 to vector<8x256xf32>
    %100 = arith.maximumf %98, %99 : vector<8x256xf32>
    %c0_49 = arith.constant 0 : index
    %c0_50 = arith.constant 0 : index
    %101 = vector.load %arg6[%c0_49, %c0_50] : memref<256x128xbf16, #tpu.memory_space<vmem>>, vector<256x128xbf16>
    %102 = arith.truncf %100 : vector<8x256xf32> to vector<8x256xbf16>
    %cst_51 = arith.constant dense<0.000000e+00> : vector<8x128xf32>
    %103 = tpu.matmul %102, %101, %cst_51 {dimension_numbers = #tpu.dot_dimension_numbers<[1], [0], [0], [1], [0, 0, 1, 1], [], []>} : vector<8x256xbf16>, vector<256x128xbf16>, vector<8x128xf32> -> vector<8x128xf32>
    %c6_52 = arith.constant 6 : index
    %c0_53 = arith.constant 0 : index
    %104 = vector.load %arg7[%c6_52, %c0_53] : memref<8x256xf32, #tpu.memory_space<vmem>>, vector<1x128xf32>
    %105 = vector.broadcast %104 : vector<1x128xf32> to vector<8x128xf32>
    %106 = arith.addf %103, %105 : vector<8x128xf32>
    %c0_54 = arith.constant 0 : index
    %c0_55 = arith.constant 0 : index
    %c0_56 = arith.constant 0 : index
    %107 = vector.load %arg9[%c0_54, %c0_55, %c0_56] : memref<1x8x128xf32, #tpu.memory_space<vmem>>, vector<1x8x128xf32>
    %108 = vector.shape_cast %107 : vector<1x8x128xf32> to vector<8x128xf32>
    %109 = vector.shape_cast %106 : vector<8x128xf32> to vector<1x8x128xf32>
    tpu.vector_store %arg9[%c0_54, %c0_55, %c0_56], %109 {strides = array<i32>} : memref<1x8x128xf32, #tpu.memory_space<vmem>>, vector<1x8x128xf32>,
    %c4_57 = arith.constant 4 : index
    %c0_58 = arith.constant 0 : index
    %c0_59 = arith.constant 0 : index
    %110 = vector.load %arg4[%c4_57, %c0_58, %c0_59] : memref<6x256x256xbf16, #tpu.memory_space<vmem>>, vector<1x256x256xbf16>
    %111 = vector.shape_cast %110 : vector<1x256x256xbf16> to vector<256x256xbf16>
    %112 = arith.truncf %91 : vector<8x256xf32> to vector<8x256xbf16>
    %cst_60 = arith.constant dense<0.000000e+00> : vector<8x256xf32>
    %113 = tpu.matmul %112, %111, %cst_60 {dimension_numbers = #tpu.dot_dimension_numbers<[1], [0], [0], [1], [0, 0, 1, 1], [], []>} : vector<8x256xbf16>, vector<256x256xbf16>, vector<8x256xf32> -> vector<8x256xf32>
    %c4_61 = arith.constant 4 : index
    %c0_62 = arith.constant 0 : index
    %114 = vector.load %arg7[%c4_61, %c0_62] : memref<8x256xf32, #tpu.memory_space<vmem>>, vector<1x256xf32>
    %115 = vector.broadcast %114 : vector<1x256xf32> to vector<8x256xf32>
    %116 = arith.addf %113, %115 : vector<8x256xf32>
    %cst_63 = arith.constant 0.000000e+00 : f32
    %117 = vector.broadcast %cst_63 : f32 to vector<8x256xf32>
    %118 = arith.maximumf %116, %117 : vector<8x256xf32>
    %c5_64 = arith.constant 5 : index
    %c0_65 = arith.constant 0 : index
    %c0_66 = arith.constant 0 : index
    %119 = vector.load %arg4[%c5_64, %c0_65, %c0_66] : memref<6x256x256xbf16, #tpu.memory_space<vmem>>, vector<1x256x256xbf16>
    %120 = vector.shape_cast %119 : vector<1x256x256xbf16> to vector<256x256xbf16>
    %121 = arith.truncf %118 : vector<8x256xf32> to vector<8x256xbf16>
    %cst_67 = arith.constant dense<0.000000e+00> : vector<8x256xf32>
    %122 = tpu.matmul %121, %120, %cst_67 {dimension_numbers = #tpu.dot_dimension_numbers<[1], [0], [0], [1], [0, 0, 1, 1], [], []>} : vector<8x256xbf16>, vector<256x256xbf16>, vector<8x256xf32> -> vector<8x256xf32>
    %c5_68 = arith.constant 5 : index
    %c0_69 = arith.constant 0 : index
    %123 = vector.load %arg7[%c5_68, %c0_69] : memref<8x256xf32, #tpu.memory_space<vmem>>, vector<1x256xf32>
    %124 = vector.broadcast %123 : vector<1x256xf32> to vector<8x256xf32>
    %125 = arith.addf %122, %124 : vector<8x256xf32>
    %c0_70 = arith.constant 0 : index
    %c0_71 = arith.constant 0 : index
    %c0_72 = arith.constant 0 : index
    %126 = vector.load %arg11[%c0_70, %c0_71, %c0_72] : memref<1x8x256xf32, #tpu.memory_space<vmem>>, vector<1x8x256xf32>
    %127 = vector.shape_cast %126 : vector<1x8x256xf32> to vector<8x256xf32>
    %128 = vector.shape_cast %125 : vector<8x256xf32> to vector<1x8x256xf32>
    tpu.vector_store %arg11[%c0_70, %c0_71, %c0_72], %128 {strides = array<i32>} : memref<1x8x256xf32, #tpu.memory_space<vmem>>, vector<1x8x256xf32>,
    %c0_73 = arith.constant 0 : index
    %c0_74 = arith.constant 0 : index
    %129 = vector.load %arg12[%c0_73, %c0_74] : memref<8x256xf32, #tpu.memory_space<vmem>>, vector<8x256xf32>
    tpu.vector_store %arg12[%c0_73, %c0_74], %125 {strides = array<i32>} : memref<8x256xf32, #tpu.memory_space<vmem>>, vector<8x256xf32>,
    return
  }
  func.func @transform_0(%arg0: i32) -> (i32, i32, i32) {
    %c0_i32 = arith.constant 0 : i32
    %c0_i32_0 = arith.constant 0 : i32
    %c0_i32_1 = arith.constant 0 : i32
    return %arg0, %c0_i32, %c0_i32_0 : i32, i32, i32
  }
  func.func @transform_1(%arg0: i32) -> (i32, i32) {
    %c0_i32 = arith.constant 0 : i32
    %c0_i32_0 = arith.constant 0 : i32
    %c0_i32_1 = arith.constant 0 : i32
    return %c0_i32, %c0_i32_0 : i32, i32
  }
  func.func @transform_2(%arg0: i32) -> (i32, i32) {
    %c0_i32 = arith.constant 0 : i32
    %c0_i32_0 = arith.constant 0 : i32
    %c0_i32_1 = arith.constant 0 : i32
    return %c0_i32, %c0_i32_0 : i32, i32
  }
  func.func @transform_3(%arg0: i32) -> (i32, i32, i32) {
    %c0_i32 = arith.constant 0 : i32
    %c0_i32_0 = arith.constant 0 : i32
    %c0_i32_1 = arith.constant 0 : i32
    %c0_i32_2 = arith.constant 0 : i32
    return %c0_i32, %c0_i32_0, %c0_i32_1 : i32, i32, i32
  }
  func.func @transform_4(%arg0: i32) -> (i32, i32) {
    %c0_i32 = arith.constant 0 : i32
    %c0_i32_0 = arith.constant 0 : i32
    %c0_i32_1 = arith.constant 0 : i32
    return %c0_i32, %c0_i32_0 : i32, i32
  }
  func.func @transform_5(%arg0: i32) -> (i32, i32) {
    %c0_i32 = arith.constant 0 : i32
    %c0_i32_0 = arith.constant 0 : i32
    %c0_i32_1 = arith.constant 0 : i32
    return %c0_i32, %c0_i32_0 : i32, i32
  }
  func.func @transform_6(%arg0: i32) -> (i32, i32) {
    %c0_i32 = arith.constant 0 : i32
    %c0_i32_0 = arith.constant 0 : i32
    %c0_i32_1 = arith.constant 0 : i32
    return %c0_i32, %c0_i32_0 : i32, i32
  }
  func.func @transform_7(%arg0: i32) -> (i32, i32) {
    %c0_i32 = arith.constant 0 : i32
    %c0_i32_0 = arith.constant 0 : i32
    %c0_i32_1 = arith.constant 0 : i32
    return %c0_i32, %c0_i32_0 : i32, i32
  }
  func.func @transform_8(%arg0: i32) -> (i32, i32, i32) {
    %c0_i32 = arith.constant 0 : i32
    %c0_i32_0 = arith.constant 0 : i32
    %c0_i32_1 = arith.constant 0 : i32
    return %arg0, %c0_i32, %c0_i32_0 : i32, i32, i32
  }
  func.func @transform_9(%arg0: i32) -> (i32, i32, i32) {
    %c0_i32 = arith.constant 0 : i32
    %c0_i32_0 = arith.constant 0 : i32
    %c0_i32_1 = arith.constant 0 : i32
    return %arg0, %c0_i32, %c0_i32_0 : i32, i32, i32
  }
  func.func @transform_10(%arg0: i32) -> (i32, i32, i32) {
    %c0_i32 = arith.constant 0 : i32
    %c0_i32_0 = arith.constant 0 : i32
    %c0_i32_1 = arith.constant 0 : i32
    return %arg0, %c0_i32, %c0_i32_0 : i32, i32, i32
  }
}

</mosaic_0001>

<llo_original>
// kernel: autoencoder_forward_seq.1
$region0: #{autoencoder_forward_seq.1}
  #allocation0 [shape = 'u32[]', space=smem, size = 0x4, offset = 0x4, fixed_abs, tag = 'smem constant byte address 0x4 - core index']
  #allocation1 [shape = 'u32[144,128]{1,0:T(1,128)}', space=vmem, size = 0x12000, scoped, tag = 'internal scratch']
  #allocation2 [shape = 'f32[8,256]{1,0:T(8,128)}', space=vmem, size = 0x2000, scoped, tag = 'scratch operand']
  %s0 = inlined_call_operand.vmem [shape: f32[4,8,8], index: 0, kind: input, shape index: {}]
  %s1 = inlined_call_operand.vmem [shape: f32[8,256], index: 1, kind: input, shape index: {}]
  %s2 = inlined_call_operand.vmem [shape: f32[8,256], index: 2, kind: input, shape index: {}]
  %s3 = inlined_call_operand.hbm [shape: bf16[6,256,256], index: 3, kind: input, shape index: {}]
  %s4 = inlined_call_operand.hbm [shape: bf16[256,512], index: 4, kind: input, shape index: {}]
  %s5 = inlined_call_operand.hbm [shape: bf16[256,128], index: 5, kind: input, shape index: {}]
  %s6 = inlined_call_operand.vmem [shape: f32[8,256], index: 6, kind: input, shape index: {}]
  %s7 = inlined_call_operand.vmem [shape: f32[1,512], index: 7, kind: input, shape index: {}]
  %s8 = inlined_call_operand.vmem [shape: f32[4,8,128], index: 8, kind: output, shape index: {0}]
  %s9 = inlined_call_operand.hbm [shape: f32[4,8,256], index: 9, kind: output, shape index: {1}]
  %s10 = inlined_call_operand.hbm [shape: f32[4,8,256], index: 10, kind: output, shape index: {2}]
  %11 = xla_tuple %s8, %s9, %s10
  %s12 = sld [smem:[#allocation0]]
  $region97: #{autoencoder_forward_seq.1} parent=0
    _
  %s14 = ssub.s32 1, %s12
  %s15 = scalar_select 0, %s14, %s12
  $region1: #{autoencoder_forward_seq.1} parent=0
    #allocation3 [shape = 'u8[786432]{0}', space=vmem, size = 0xc0000, scoped, tag = 'input window, operand 3, single buffered']
    #allocation4 [shape = 's32[2]{0}', space=sflag, size = 0x8, scoped, tag = 'scoped memory for autoencoder_forward_seq.1']
    #allocation5 [shape = 's32[2]{0}', space=sflag, size = 0x8, scoped, tag = 'scoped memory for autoencoder_forward_seq.1']
    #allocation6 [shape = 'u8[262144]{0}', space=vmem, size = 0x40000, scoped, tag = 'input window, operand 4, single buffered']
    #allocation7 [shape = 's32[1]{0}', space=sflag, size = 0x4, scoped, tag = 'scoped memory for autoencoder_forward_seq.1']
    #allocation8 [shape = 'u8[65536]{0}', space=vmem, size = 0x10000, scoped, tag = 'input window, operand 5, single buffered']
    #allocation9 [shape = 'u8[16384]{0}', space=vmem, size = 0x4000, scoped, tag = 'output window, operand 1']
    #allocation10 [shape = 'u8[16384]{0}', space=vmem, size = 0x4000, scoped, tag = 'output window, operand 2']
    #allocation11 [shape = 's32[2]{0}', space=sflag, size = 0x8, scoped, tag = 'scoped memory for autoencoder_forward_seq.1']
    %16 = vsyncpa [#allocation4], 0
    %17 = vsyncpa [#allocation7], 0
    %18 = vsyncpa [#allocation5], 0
    %s19 = scalar_lea.sflag [#allocation5], 1
    %20 = vsyncpa %s19, 0
    %21 = vsyncpa [#allocation11], 0
    %s22 = scalar_lea.sflag [#allocation11], 1
    %23 = vsyncpa %s22, 0
    loop: start=0, step=1, limit=6
    $region2: #{autoencoder_forward_seq.1} parent=1 // loop_pre_header
      _
    $region3: #{autoencoder_forward_seq.1} parent=1 // loop_header
      %s25 = sphi 0, %s29
      %p26 = scmp.ge.s32.totalorder %s25, 6
      %s35 = sphi 0, %s37
      %s38 = sphi 0, %s35
      %s39 = sphi 0, %s38
      %s55 = sphi 0, %s39
      %s59 = sphi 0, %s59
      %s61 = sphi 0, %s59
      %s62 = sphi 0, %s61
      %s76 = sphi 0, %s62
      %s80 = sphi 0, %s80
      %s82 = sphi 0, %s80
      %s83 = sphi 0, %s82
      %s97 = sphi 0, %s83
      %s101 = sphi 0, %s101
      %s103 = sphi 0, %s101
      %s104 = sphi 0, %s103
      %s118 = sphi 0, %s104
      %s122 = sphi 0, %s122
      %s124 = sphi 0, %s122
      %s125 = sphi 0, %s124
      %s139 = sphi 0, %s125
      %s143 = sphi 0, %s143
      %s145 = sphi 0, %s143
      %s146 = sphi 0, %s145
      %s160 = sphi 0, %s146
      %s164 = sphi 0, %s164
      %s166 = sphi 0, %s164
      %s167 = sphi 0, %s166
      %s181 = sphi 0, %s167
      %s185 = sphi 0, %s185
      %s187 = sphi 0, %s185
      %s188 = sphi 0, %s187
      %s202 = sphi 0, %s188
      %s208 = sphi 0, %s210
      %s211 = sphi 0, %s208
      %s212 = sphi 0, %s211
      %s228 = sphi 0, %s212
      %s234 = sphi 0, %s236
      %s237 = sphi 0, %s234
      %s238 = sphi 0, %s237
      %s254 = sphi 0, %s238
      %s260 = sphi 0, %s262
      %s263 = sphi 0, %s260
      %s264 = sphi 0, %s263
      %s280 = sphi 0, %s264
    $region4: #{autoencoder_forward_seq.1} parent=1 // loop_header_branch
      %28 = sbr.rel (%p26) target = $region8
    $region5: #{autoencoder_forward_seq.1} parent=1 // loop_body
      %s30 = ssub.s32 %s25, 1
      %s31 = ssub.s32 %s25, 2
      %s32 = sadd.s32 %s25, 1
      %s33 = ssub.s32 %s25, %s32
      %p34 = scmp.eq.s32.totalorder %s33, 0
      %s36 = sadd.s32 %s35, 1
      %s37 = scalar_select %p34, %s35, %s36
      %p40 = pneg %p34
      %p41 = scmp.eq.s32.totalorder %s25, 3
      %p42 = por %p40, %p41
      %p43 = scmp.ne.s32.totalorder %s35, %s38
      %p44 = scmp.eq.s32.totalorder %s25, 0
      %p45 = por %p43, %p44
      %p46 = scmp.ne.s32.totalorder %s35, %s38
      %p47 = scmp.eq.s32.totalorder %s30, 3
      %p48 = por %p46, %p47
      %p49 = scmp.ne.s32.totalorder %s38, %s39
      %p50 = scmp.eq.s32.totalorder %s30, 0
      %p51 = por %p49, %p50
      %p52 = scmp.ne.s32.totalorder %s38, %s39
      %p53 = scmp.eq.s32.totalorder %s31, 3
      %p54 = por %p52, %p53
      %p56 = scmp.ne.s32.totalorder %s39, %s55
      %p57 = scmp.eq.s32.totalorder %s31, 0
      %p58 = por %p56, %p57
      %s60 = sadd.s32 %s59, 1
      %p63 = scmp.eq.s32.totalorder %s25, 3
      %p64 = scmp.ne.s32.totalorder %s59, %s61
      %p65 = scmp.eq.s32.totalorder %s25, 0
      %p66 = por %p64, %p65
      %p67 = scmp.ne.s32.totalorder %s59, %s61
      %p68 = scmp.eq.s32.totalorder %s30, 3
      %p69 = por %p67, %p68
      %p70 = scmp.ne.s32.totalorder %s61, %s62
      %p71 = scmp.eq.s32.totalorder %s30, 0
      %p72 = por %p70, %p71
      %p73 = scmp.ne.s32.totalorder %s61, %s62
      %p74 = scmp.eq.s32.totalorder %s31, 3
      %p75 = por %p73, %p74
      %p77 = scmp.ne.s32.totalorder %s62, %s76
      %p78 = scmp.eq.s32.totalorder %s31, 0
      %p79 = por %p77, %p78
      %s81 = sadd.s32 %s80, 1
      %p84 = scmp.eq.s32.totalorder %s25, 3
      %p85 = scmp.ne.s32.totalorder %s80, %s82
      %p86 = scmp.eq.s32.totalorder %s25, 0
      %p87 = por %p85, %p86
      %p88 = scmp.ne.s32.totalorder %s80, %s82
      %p89 = scmp.eq.s32.totalorder %s30, 3
      %p90 = por %p88, %p89
      %p91 = scmp.ne.s32.totalorder %s82, %s83
      %p92 = scmp.eq.s32.totalorder %s30, 0
      %p93 = por %p91, %p92
      %p94 = scmp.ne.s32.totalorder %s82, %s83
      %p95 = scmp.eq.s32.totalorder %s31, 3
      %p96 = por %p94, %p95
      %p98 = scmp.ne.s32.totalorder %s83, %s97
      %p99 = scmp.eq.s32.totalorder %s31, 0
      %p100 = por %p98, %p99
      %s102 = sadd.s32 %s101, 1
      %p105 = scmp.eq.s32.totalorder %s25, 3
      %p106 = scmp.ne.s32.totalorder %s101, %s103
      %p107 = scmp.eq.s32.totalorder %s25, 0
      %p108 = por %p106, %p107
      %p109 = scmp.ne.s32.totalorder %s101, %s103
      %p110 = scmp.eq.s32.totalorder %s30, 3
      %p111 = por %p109, %p110
      %p112 = scmp.ne.s32.totalorder %s103, %s104
      %p113 = scmp.eq.s32.totalorder %s30, 0
      %p114 = por %p112, %p113
      %p115 = scmp.ne.s32.totalorder %s103, %s104
      %p116 = scmp.eq.s32.totalorder %s31, 3
      %p117 = por %p115, %p116
      %p119 = scmp.ne.s32.totalorder %s104, %s118
      %p120 = scmp.eq.s32.totalorder %s31, 0
      %p121 = por %p119, %p120
      %s123 = sadd.s32 %s122, 1
      %p126 = scmp.eq.s32.totalorder %s25, 3
      %p127 = scmp.ne.s32.totalorder %s122, %s124
      %p128 = scmp.eq.s32.totalorder %s25, 0
      %p129 = por %p127, %p128
      %p130 = scmp.ne.s32.totalorder %s122, %s124
      %p131 = scmp.eq.s32.totalorder %s30, 3
      %p132 = por %p130, %p131
      %p133 = scmp.ne.s32.totalorder %s124, %s125
      %p134 = scmp.eq.s32.totalorder %s30, 0
      %p135 = por %p133, %p134
      %p136 = scmp.ne.s32.totalorder %s124, %s125
      %p137 = scmp.eq.s32.totalorder %s31, 3
      %p138 = por %p136, %p137
      %p140 = scmp.ne.s32.totalorder %s125, %s139
      %p141 = scmp.eq.s32.totalorder %s31, 0
      %p142 = por %p140, %p141
      %s144 = sadd.s32 %s143, 1
      %p147 = scmp.eq.s32.totalorder %s25, 3
      %p148 = scmp.ne.s32.totalorder %s143, %s145
      %p149 = scmp.eq.s32.totalorder %s25, 0
      %p150 = por %p148, %p149
      %p151 = scmp.ne.s32.totalorder %s143, %s145
      %p152 = scmp.eq.s32.totalorder %s30, 3
      %p153 = por %p151, %p152
      %p154 = scmp.ne.s32.totalorder %s145, %s146
      %p155 = scmp.eq.s32.totalorder %s30, 0
      %p156 = por %p154, %p155
      %p157 = scmp.ne.s32.totalorder %s145, %s146
      %p158 = scmp.eq.s32.totalorder %s31, 3
      %p159 = por %p157, %p158
      %p161 = scmp.ne.s32.totalorder %s146, %s160
      %p162 = scmp.eq.s32.totalorder %s31, 0
      %p163 = por %p161, %p162
      %s165 = sadd.s32 %s164, 1
      %p168 = scmp.eq.s32.totalorder %s25, 3
      %p169 = scmp.ne.s32.totalorder %s164, %s166
      %p170 = scmp.eq.s32.totalorder %s25, 0
      %p171 = por %p169, %p170
      %p172 = scmp.ne.s32.totalorder %s164, %s166
      %p173 = scmp.eq.s32.totalorder %s30, 3
      %p174 = por %p172, %p173
      %p175 = scmp.ne.s32.totalorder %s166, %s167
      %p176 = scmp.eq.s32.totalorder %s30, 0
      %p177 = por %p175, %p176
      %p178 = scmp.ne.s32.totalorder %s166, %s167
      %p179 = scmp.eq.s32.totalorder %s31, 3
      %p180 = por %p178, %p179
      %p182 = scmp.ne.s32.totalorder %s167, %s181
      %p183 = scmp.eq.s32.totalorder %s31, 0
      %p184 = por %p182, %p183
      %s186 = sadd.s32 %s185, 1
      %p189 = scmp.eq.s32.totalorder %s25, 3
      %p190 = scmp.ne.s32.totalorder %s185, %s187
      %p191 = scmp.eq.s32.totalorder %s25, 0
      %p192 = por %p190, %p191
      %p193 = scmp.ne.s32.totalorder %s185, %s187
      %p194 = scmp.eq.s32.totalorder %s30, 3
      %p195 = por %p193, %p194
      %p196 = scmp.ne.s32.totalorder %s187, %s188
      %p197 = scmp.eq.s32.totalorder %s30, 0
      %p198 = por %p196, %p197
      %p199 = scmp.ne.s32.totalorder %s187, %s188
      %p200 = scmp.eq.s32.totalorder %s31, 3
      %p201 = por %p199, %p200
      %p203 = scmp.ne.s32.totalorder %s188, %s202
      %p204 = scmp.eq.s32.totalorder %s31, 0
      %p205 = por %p203, %p204
      %s206 = ssub.s32 %s25, %s32
      %p207 = scmp.eq.s32.totalorder %s206, 0
      %s209 = sadd.s32 %s208, 1
      %s210 = scalar_select %p207, %s208, %s209
      %p213 = pneg %p207
      %p214 = scmp.eq.s32.totalorder %s25, 3
      %p215 = por %p213, %p214
      %p216 = scmp.ne.s32.totalorder %s208, %s211
      %p217 = scmp.eq.s32.totalorder %s25, 0
      %p218 = por %p216, %p217
      %p219 = scmp.ne.s32.totalorder %s208, %s211
      %p220 = scmp.eq.s32.totalorder %s30, 3
      %p221 = por %p219, %p220
      %p222 = scmp.ne.s32.totalorder %s211, %s212
      %p223 = scmp.eq.s32.totalorder %s30, 0
      %p224 = por %p222, %p223
      %p225 = scmp.ne.s32.totalorder %s211, %s212
      %p226 = scmp.eq.s32.totalorder %s31, 3
      %p227 = por %p225, %p226
      %p229 = scmp.ne.s32.totalorder %s212, %s228
      %p230 = scmp.eq.s32.totalorder %s31, 0
      %p231 = por %p229, %p230
      %s232 = ssub.s32 %s25, %s32
      %p233 = scmp.eq.s32.totalorder %s232, 0
      %s235 = sadd.s32 %s234, 1
      %s236 = scalar_select %p233, %s234, %s235
      %p239 = pneg %p233
      %p240 = scmp.eq.s32.totalorder %s25, 3
      %p241 = por %p239, %p240
      %p242 = scmp.ne.s32.totalorder %s234, %s237
      %p243 = scmp.eq.s32.totalorder %s25, 0
      %p244 = por %p242, %p243
      %p245 = scmp.ne.s32.totalorder %s234, %s237
      %p246 = scmp.eq.s32.totalorder %s30, 3
      %p247 = por %p245, %p246
      %p248 = scmp.ne.s32.totalorder %s237, %s238
      %p249 = scmp.eq.s32.totalorder %s30, 0
      %p250 = por %p248, %p249
      %p251 = scmp.ne.s32.totalorder %s237, %s238
      %p252 = scmp.eq.s32.totalorder %s31, 3
      %p253 = por %p251, %p252
      %p255 = scmp.ne.s32.totalorder %s238, %s254
      %p256 = scmp.eq.s32.totalorder %s31, 0
      %p257 = por %p255, %p256
      %s258 = ssub.s32 %s25, %s32
      %p259 = scmp.eq.s32.totalorder %s258, 0
      %s261 = sadd.s32 %s260, 1
      %s262 = scalar_select %p259, %s260, %s261
      %p265 = pneg %p259
      %p266 = scmp.eq.s32.totalorder %s25, 3
      %p267 = por %p265, %p266
      %p268 = scmp.ne.s32.totalorder %s260, %s263
      %p269 = scmp.eq.s32.totalorder %s25, 0
      %p270 = por %p268, %p269
      %p271 = scmp.ne.s32.totalorder %s260, %s263
      %p272 = scmp.eq.s32.totalorder %s30, 3
      %p273 = por %p271, %p272
      %p274 = scmp.ne.s32.totalorder %s263, %s264
      %p275 = scmp.eq.s32.totalorder %s30, 0
      %p276 = por %p274, %p275
      %p277 = scmp.ne.s32.totalorder %s263, %s264
      %p278 = scmp.eq.s32.totalorder %s31, 3
      %p279 = por %p277, %p278
      %p281 = scmp.ne.s32.totalorder %s264, %s280
      %p282 = scmp.eq.s32.totalorder %s31, 0
      %p283 = por %p281, %p282
      %p284 = scmp.le.s32.totalorder 1, %s25
      %p285 = scmp.lt.s32.totalorder %s25, 5
      %p286 = pnand %p284, %p285
      %p287 = pneg %p286
      // Predicated region
      $region9: #{autoencoder_forward_seq.1} parent=5 // pred_check
        _
      $region10: #{autoencoder_forward_seq.1} parent=5 // pred_check_branch
        %289 = sbr.rel (%p286) target = $region12
      $region11: #{autoencoder_forward_seq.1} parent=5 // pred_region
        %s290 = ssub.s32 %s25, 1
        // Predicated region
        $region13: #{autoencoder_forward_seq.1} parent=11 // pred_check
          %p291 = pneg %p72
        $region14: #{autoencoder_forward_seq.1} parent=11 // pred_check_branch
          %293 = sbr.rel (%p291) target = $region16
        $region15: #{autoencoder_forward_seq.1} parent=11 // pred_region
          _
        $region16: #{autoencoder_forward_seq.1} parent=11 // pred_fallthru
          _
        // Predicated region
        $region17: #{autoencoder_forward_seq.1} parent=11 // pred_check
          %p294 = pneg %p93
        $region18: #{autoencoder_forward_seq.1} parent=11 // pred_check_branch
          %296 = sbr.rel (%p294) target = $region20
        $region19: #{autoencoder_forward_seq.1} parent=11 // pred_region
          _
        $region20: #{autoencoder_forward_seq.1} parent=11 // pred_fallthru
          _
        // Predicated region
        $region21: #{autoencoder_forward_seq.1} parent=11 // pred_check
          %p297 = pneg %p114
        $region22: #{autoencoder_forward_seq.1} parent=11 // pred_check_branch
          %299 = sbr.rel (%p297) target = $region24
        $region23: #{autoencoder_forward_seq.1} parent=11 // pred_region
          %s301 = ssub.s32 24576, 24576
          %302 = vsyncadd [#allocation4], %s301
          %s303 = sshll.u32 [#allocation3], 4
          %s304 = int_to_ptr.vmem [resolvable:$true] %s303
          %309 = dma.hbm_to_vmem [thread:$0]  %s3, 24576, %s304, [#allocation4], 128, 128, 8
        $region24: #{autoencoder_forward_seq.1} parent=11 // pred_fallthru
          _
        // Predicated region
        $region25: #{autoencoder_forward_seq.1} parent=11 // pred_check
          %p310 = pneg %p135
        $region26: #{autoencoder_forward_seq.1} parent=11 // pred_check_branch
          %312 = sbr.rel (%p310) target = $region28
        $region27: #{autoencoder_forward_seq.1} parent=11 // pred_region
          %s314 = ssub.s32 8192, 8192
          %315 = vsyncadd [#allocation7], %s314
          %s316 = sshll.u32 [#allocation6], 4
          %s317 = int_to_ptr.vmem [resolvable:$true] %s316
          %322 = dma.hbm_to_vmem [thread:$0]  %s4, 8192, %s317, [#allocation7], 256, 256, 16
        $region28: #{autoencoder_forward_seq.1} parent=11 // pred_fallthru
          _
        // Predicated region
        $region29: #{autoencoder_forward_seq.1} parent=11 // pred_check
          %p323 = pneg %p156
        $region30: #{autoencoder_forward_seq.1} parent=11 // pred_check_branch
          %325 = sbr.rel (%p323) target = $region32
        $region31: #{autoencoder_forward_seq.1} parent=11 // pred_region
          %s327 = ssub.s32 2048, 2048
          %328 = vsyncadd [#allocation7], %s327
          %s329 = sshll.u32 [#allocation8], 4
          %s330 = int_to_ptr.vmem [resolvable:$true] %s329
          %335 = dma.hbm_to_vmem [thread:$0]  %s5, 2048, %s330, [#allocation7], 64, 64, 4
        $region32: #{autoencoder_forward_seq.1} parent=11 // pred_fallthru
          _
        // Predicated region
        $region33: #{autoencoder_forward_seq.1} parent=11 // pred_check
          %p336 = pneg %p177
        $region34: #{autoencoder_forward_seq.1} parent=11 // pred_check_branch
          %338 = sbr.rel (%p336) target = $region36
        $region35: #{autoencoder_forward_seq.1} parent=11 // pred_region
          _
        $region36: #{autoencoder_forward_seq.1} parent=11 // pred_fallthru
          _
        // Predicated region
        $region37: #{autoencoder_forward_seq.1} parent=11 // pred_check
          %p339 = pneg %p198
        $region38: #{autoencoder_forward_seq.1} parent=11 // pred_check_branch
          %341 = sbr.rel (%p339) target = $region40
        $region39: #{autoencoder_forward_seq.1} parent=11 // pred_region
          _
        $region40: #{autoencoder_forward_seq.1} parent=11 // pred_fallthru
          _
      $region12: #{autoencoder_forward_seq.1} parent=5 // pred_fallthru
        _
      %p342 = scmp.lt.s32.totalorder %s25, 4
      // Predicated region
      $region41: #{autoencoder_forward_seq.1} parent=5 // pred_check
        %p343 = pneg %p342
      $region42: #{autoencoder_forward_seq.1} parent=5 // pred_check_branch
        %345 = sbr.rel (%p343) target = $region44
      $region43: #{autoencoder_forward_seq.1} parent=5 // pred_region
        // Predicated region
        $region45: #{autoencoder_forward_seq.1} parent=43 // pred_check
          %p346 = pneg %p45
        $region46: #{autoencoder_forward_seq.1} parent=43 // pred_check_branch
          %348 = sbr.rel (%p346) target = $region48
        $region47: #{autoencoder_forward_seq.1} parent=43 // pred_region
          %p349 = scmp.lt.s32.totalorder %s25, 3
          %s350 = scalar_select %p349, %s25, 3
          %s351 = smul.addr %s350, 8
          %s352 = scalar_lea.vmem %s0, %s351
        $region48: #{autoencoder_forward_seq.1} parent=43 // pred_fallthru
          _
      $region44: #{autoencoder_forward_seq.1} parent=5 // pred_fallthru
        _
      %p353 = scmp.le.s32.totalorder 1, %s25
      %p354 = scmp.lt.s32.totalorder %s25, 5
      %p355 = pnand %p353, %p354
      %p356 = pneg %p355
      // Predicated region
      $region49: #{autoencoder_forward_seq.1} parent=5 // pred_check
        _
      $region50: #{autoencoder_forward_seq.1} parent=5 // pred_check_branch
        %358 = sbr.rel (%p355) target = $region52
      $region51: #{autoencoder_forward_seq.1} parent=5 // pred_region
        %s359 = ssub.s32 %s25, 1
        // Predicated region
        $region53: #{autoencoder_forward_seq.1} parent=51 // pred_check
          %p360 = pneg %p114
        $region54: #{autoencoder_forward_seq.1} parent=51 // pred_check_branch
          %362 = sbr.rel (%p360) target = $region56
        $region55: #{autoencoder_forward_seq.1} parent=51 // pred_region
          %363 = dma.done [#allocation4], 24576
        $region56: #{autoencoder_forward_seq.1} parent=51 // pred_fallthru
          _
        // Predicated region
        $region57: #{autoencoder_forward_seq.1} parent=51 // pred_check
          %p364 = pneg %p135
        $region58: #{autoencoder_forward_seq.1} parent=51 // pred_check_branch
          %366 = sbr.rel (%p364) target = $region60
        $region59: #{autoencoder_forward_seq.1} parent=51 // pred_region
          %367 = dma.done [#allocation7], 8192
        $region60: #{autoencoder_forward_seq.1} parent=51 // pred_fallthru
          _
        // Predicated region
        $region61: #{autoencoder_forward_seq.1} parent=51 // pred_check
          %p368 = pneg %p156
        $region62: #{autoencoder_forward_seq.1} parent=51 // pred_check_branch
          %370 = sbr.rel (%p368) target = $region64
        $region63: #{autoencoder_forward_seq.1} parent=51 // pred_region
          %371 = dma.done [#allocation7], 2048
        $region64: #{autoencoder_forward_seq.1} parent=51 // pred_fallthru
          _
        %p372 = scmp.lt.s32.totalorder %s30, 3
        %s373 = scalar_select %p372, %s30, 3
        %s374 = smul.addr %s373, 8
        %s375 = scalar_lea.vmem %s0, %s374
        %p376 = pneg %p51
        %p377 = pneg %p48
        %p378 = pneg %p72
        %p379 = pneg %p69
        %p380 = pneg %p93
        %p381 = pneg %p90
        %p382 = pneg %p114
        %p383 = pneg %p111
        %p384 = pneg %p135
        %p385 = pneg %p132
        %p386 = pneg %p156
        %p387 = pneg %p153
        %p388 = pneg %p177
        %p389 = pneg %p174
        %p390 = pneg %p198
        %p391 = pneg %p195
        %p392 = pneg %p224
        %p393 = pneg %p221
        %p394 = scmp.lt.s32.totalorder %s30, 3
        %s395 = scalar_select %p394, %s30, 3
        %s396 = smul.addr %s395, 8
        %s397 = scalar_lea.vmem %s8, %s396
        %p398 = pneg %p250
        %p399 = pneg %p247
        %s400 = sand.u32 %s237, 1
        %s401 = scalar_lea.sflag [#allocation5], %s400
        %s402 = sand.u32 %s237, 1
        %s403 = smul.addr %s402, 16
        %s404 = scalar_lea.vmem [#allocation9], %s403
        %p405 = pneg %p276
        %p406 = pneg %p273
        %s407 = sand.u32 %s263, 1
        %s408 = scalar_lea.sflag [#allocation11], %s407
        %s409 = sand.u32 %s263, 1
        %s410 = smul.addr %s409, 16
        %s411 = scalar_lea.vmem [#allocation10], %s410
        %p412 = scmp.lt.s32.totalorder %s30, 3
        %s413 = scalar_select %p412, %s30, 3
        %s414 = smul.addr %s413, 8
        %s415 = scalar_lea.vmem %s0, %s414
        %p416 = scmp.lt.s32.totalorder %s30, 3
        %s417 = scalar_select %p416, %s30, 3
        %s418 = smul.addr %s417, 8
        %s419 = scalar_lea.vmem %s8, %s418
        %p421 = scmp.eq.s32.totalorder %s30, 0
        // Predicated region
        $region65: #{autoencoder_forward_seq.1} parent=51 // pred_check
          %p422 = pneg %p421
        $region66: #{autoencoder_forward_seq.1} parent=51 // pred_check_branch
          %424 = sbr.rel (%p422) target = $region68
        $region67: #{autoencoder_forward_seq.1} parent=51 // pred_region
          %v425 = vld [vmem:[%s1] sm:$0xff]
          %v426 = vld [vmem:[%s1 + $0x8] sm:$0xff]
          %427 = vst [vmem:[#allocation2] sm:$0xff] %v425
          %428 = vst [vmem:[#allocation2 + $0x8] sm:$0xff] %v426
        $region68: #{autoencoder_forward_seq.1} parent=51 // pred_fallthru
          _
        %v429 = vld [vmem:[%s415] sm:$0xff]
        %v430 = vld [vmem:[#allocation2] sm:$0xff]
        %v431 = vld [vmem:[#allocation2 + $0x8] sm:$0xff]
        %v432 = vld [vmem:[#allocation3] sm:$0xff]
        %v433 = vld [vmem:[#allocation3 + $0x8] sm:$0xff]
        %v434 = vld [vmem:[#allocation3 + $0x10] sm:$0xff]
        %v435 = vld [vmem:[#allocation3 + $0x18] sm:$0xff]
        %v436 = vld [vmem:[#allocation3 + $0x20] sm:$0xff]
        %v437 = vld [vmem:[#allocation3 + $0x28] sm:$0xff]
        %v438 = vld [vmem:[#allocation3 + $0x30] sm:$0xff]
        %v439 = vld [vmem:[#allocation3 + $0x38] sm:$0xff]
        %v440 = vld [vmem:[#allocation3 + $0x40] sm:$0xff]
        %v441 = vld [vmem:[#allocation3 + $0x48] sm:$0xff]
        %v442 = vld [vmem:[#allocation3 + $0x50] sm:$0xff]
        %v443 = vld [vmem:[#allocation3 + $0x58] sm:$0xff]
        %v444 = vld [vmem:[#allocation3 + $0x60] sm:$0xff]
        %v445 = vld [vmem:[#allocation3 + $0x68] sm:$0xff]
        %v446 = vld [vmem:[#allocation3 + $0x70] sm:$0xff]
        %v447 = vld [vmem:[#allocation3 + $0x78] sm:$0xff]
        %v448 = vld [vmem:[#allocation3 + $0x80] sm:$0xff]
        %v449 = vld [vmem:[#allocation3 + $0x88] sm:$0xff]
        %v450 = vld [vmem:[#allocation3 + $0x90] sm:$0xff]
        %v451 = vld [vmem:[#allocation3 + $0x98] sm:$0xff]
        %v452 = vld [vmem:[#allocation3 + $0xa0] sm:$0xff]
        %v453 = vld [vmem:[#allocation3 + $0xa8] sm:$0xff]
        %v454 = vld [vmem:[#allocation3 + $0xb0] sm:$0xff]
        %v455 = vld [vmem:[#allocation3 + $0xb8] sm:$0xff]
        %v456 = vld [vmem:[#allocation3 + $0xc0] sm:$0xff]
        %v457 = vld [vmem:[#allocation3 + $0xc8] sm:$0xff]
        %v458 = vld [vmem:[#allocation3 + $0xd0] sm:$0xff]
        %v459 = vld [vmem:[#allocation3 + $0xd8] sm:$0xff]
        %v460 = vld [vmem:[#allocation3 + $0xe0] sm:$0xff]
        %v461 = vld [vmem:[#allocation3 + $0xe8] sm:$0xff]
        %v462 = vld [vmem:[#allocation3 + $0xf0] sm:$0xff]
        %v463 = vld [vmem:[#allocation3 + $0xf8] sm:$0xff]
        %v464 = vpack.c.bf16 %v430, %v430
        %v465 = vpack.c.bf16 %v431, %v431
        %v466 = vld [vmem:[%s6] ss:$8 sm:$0x3]
        %v468 = vlaneseq
        %v469 = vshrl.u32 %v468, 7
        %v470 = vsub.s32 0, %v469
        %v471 = vrot.slane %v466, %v470
        %v472 = vlaneseq
        %v473 = vshrl.u32 %v472, 7
        %v474 = vsub.s32 1, %v473
        %v475 = vrot.slane %v466, %v474
        %v510 = vunpack.c.l.b16 %v432
        %v511 = vunpack.c.h.b16 %v432
        %v512 = vunpack.c.l.b16 %v433
        %v513 = vunpack.c.h.b16 %v433
        %v514 = vunpack.c.l.b16 %v434
        %v515 = vunpack.c.h.b16 %v434
        %v516 = vunpack.c.l.b16 %v435
        %v517 = vunpack.c.h.b16 %v435
        %v518 = vunpack.c.l.b16 %v436
        %v519 = vunpack.c.h.b16 %v436
        %v520 = vunpack.c.l.b16 %v437
        %v521 = vunpack.c.h.b16 %v437
        %v522 = vunpack.c.l.b16 %v438
        %v523 = vunpack.c.h.b16 %v438
        %v524 = vunpack.c.l.b16 %v439
        %v525 = vunpack.c.h.b16 %v439
        %v526 = vunpack.c.l.b16 %v440
        %v527 = vunpack.c.h.b16 %v440
        %v528 = vunpack.c.l.b16 %v441
        %v529 = vunpack.c.h.b16 %v441
        %v530 = vunpack.c.l.b16 %v442
        %v531 = vunpack.c.h.b16 %v442
        %v532 = vunpack.c.l.b16 %v443
        %v533 = vunpack.c.h.b16 %v443
        %v534 = vunpack.c.l.b16 %v444
        %v535 = vunpack.c.h.b16 %v444
        %v536 = vunpack.c.l.b16 %v445
        %v537 = vunpack.c.h.b16 %v445
        %v538 = vunpack.c.l.b16 %v446
        %v539 = vunpack.c.h.b16 %v446
        %v540 = vunpack.c.l.b16 %v447
        %v541 = vunpack.c.h.b16 %v447
        %v542 = vunpack.c.l.b16 %v448
        %v543 = vunpack.c.h.b16 %v448
        %v544 = vunpack.c.l.b16 %v449
        %v545 = vunpack.c.h.b16 %v449
        %v546 = vunpack.c.l.b16 %v450
        %v547 = vunpack.c.h.b16 %v450
        %v548 = vunpack.c.l.b16 %v451
        %v549 = vunpack.c.h.b16 %v451
        %v550 = vunpack.c.l.b16 %v452
        %v551 = vunpack.c.h.b16 %v452
        %v552 = vunpack.c.l.b16 %v453
        %v553 = vunpack.c.h.b16 %v453
        %v554 = vunpack.c.l.b16 %v454
        %v555 = vunpack.c.h.b16 %v454
        %v556 = vunpack.c.l.b16 %v455
        %v557 = vunpack.c.h.b16 %v455
        %v558 = vunpack.c.l.b16 %v456
        %v559 = vunpack.c.h.b16 %v456
        %v560 = vunpack.c.l.b16 %v457
        %v561 = vunpack.c.h.b16 %v457
        %v562 = vunpack.c.l.b16 %v458
        %v563 = vunpack.c.h.b16 %v458
        %v564 = vunpack.c.l.b16 %v459
        %v565 = vunpack.c.h.b16 %v459
        %v566 = vunpack.c.l.b16 %v460
        %v567 = vunpack.c.h.b16 %v460
        %v568 = vunpack.c.l.b16 %v461
        %v569 = vunpack.c.h.b16 %v461
        %v570 = vunpack.c.l.b16 %v462
        %v571 = vunpack.c.h.b16 %v462
        %v572 = vunpack.c.l.b16 %v463
        %v573 = vunpack.c.h.b16 %v463
        %v574 = vpack.c.b16 %v512, %v510
        %v575 = vpack.c.b16 %v513, %v511
        %v576 = vpack.c.b16 %v516, %v514
        %v577 = vpack.c.b16 %v517, %v515
        %v578 = vpack.c.b16 %v520, %v518
        %v579 = vpack.c.b16 %v521, %v519
        %v580 = vpack.c.b16 %v524, %v522
        %v581 = vpack.c.b16 %v525, %v523
        %v582 = vpack.c.b16 %v528, %v526
        %v583 = vpack.c.b16 %v529, %v527
        %v584 = vpack.c.b16 %v532, %v530
        %v585 = vpack.c.b16 %v533, %v531
        %v586 = vpack.c.b16 %v536, %v534
        %v587 = vpack.c.b16 %v537, %v535
        %v588 = vpack.c.b16 %v540, %v538
        %v589 = vpack.c.b16 %v541, %v539
        %v590 = vpack.c.b16 %v544, %v542
        %v591 = vpack.c.b16 %v545, %v543
        %v592 = vpack.c.b16 %v548, %v546
        %v593 = vpack.c.b16 %v549, %v547
        %v594 = vpack.c.b16 %v552, %v550
        %v595 = vpack.c.b16 %v553, %v551
        %v596 = vpack.c.b16 %v556, %v554
        %v597 = vpack.c.b16 %v557, %v555
        %v598 = vpack.c.b16 %v560, %v558
        %v599 = vpack.c.b16 %v561, %v559
        %v600 = vpack.c.b16 %v564, %v562
        %v601 = vpack.c.b16 %v565, %v563
        %v602 = vpack.c.b16 %v568, %v566
        %v603 = vpack.c.b16 %v569, %v567
        %v604 = vpack.c.b16 %v572, %v570
        %v605 = vpack.c.b16 %v573, %v571
        %638 = vmatprep.subr.bf16.mxu0 %v589
        %639 = vmatpush1.bf16.msra.mxu0 %v588
        %640 = vmatprep.subr.bf16.mxu0 %v587
        %641 = vmatpush1.bf16.msra.mxu0 %v586
        %642 = vmatprep.subr.bf16.mxu0 %v585
        %643 = vmatpush1.bf16.msra.mxu0 %v584
        %644 = vmatprep.subr.bf16.mxu0 %v583
        %645 = vmatpush1.bf16.msra.mxu0 %v582
        %646 = vmatprep.subr.bf16.mxu0 %v581
        %647 = vmatpush1.bf16.msra.mxu0 %v580
        %648 = vmatprep.subr.bf16.mxu0 %v579
        %649 = vmatpush1.bf16.msra.mxu0 %v578
        %650 = vmatprep.subr.bf16.mxu0 %v577
        %651 = vmatpush1.bf16.msra.mxu0 %v576
        %652 = vmatprep.subr.bf16.mxu0 %v575
        %653 = vmatpush1.bf16.msra.mxu0 %v574
        %654 = vmatprep.subr.bf16.mxu0 %v605
        %655 = vmatpush2.bf16.msra.mxu0 %v604
        %656 = vmatprep.subr.bf16.mxu0 %v603
        %657 = vmatpush2.bf16.msra.mxu0 %v602
        %658 = vmatprep.subr.bf16.mxu0 %v601
        %659 = vmatpush2.bf16.msra.mxu0 %v600
        %660 = vmatprep.subr.bf16.mxu0 %v599
        %661 = vmatpush2.bf16.msra.mxu0 %v598
        %662 = vmatprep.subr.bf16.mxu0 %v597
        %663 = vmatpush2.bf16.msra.mxu0 %v596
        %664 = vmatprep.subr.bf16.mxu0 %v595
        %665 = vmatpush2.bf16.msra.mxu0 %v594
        %666 = vmatprep.subr.bf16.mxu0 %v593
        %667 = vmatpush2.bf16.msra.mxu0 %v592
        %668 = vmatprep.subr.bf16.mxu0 %v591
        %669 = vmatpush2.bf16.msra.mxu0 %v590
        %670 = vmatprep.mubr.bf16.mxu0 %v465
        %671 = vmatmul.mubr.bf16.gmra.mxu0 %v464
        %v672 = vpop.f32.mrf.mxu0
        %v673 = vadd.f32 %v471, %v672
        %v674 = vpop.f32.mrf.mxu0
        %v675 = vadd.f32 %v475, %v674
        %v676 = vpop.f32.mrf.mxu0
        %v677 = vpop.f32.mrf.mxu0
        %678 = vdwg.mxu0
        %v679 = vld [vmem:[%s2] ss:$8 sm:$0x3]
        %681 = vset.pattern.permute.xlu0 0
        %682 = vperm.xlu0 %681, %v429
        %v683 = vpop.permute.xlu0 %682
        %v686 = vlaneseq
        %v687 = vshrl.u32 %v686, 7
        %v688 = vsub.s32 0, %v687
        %v689 = vrot.slane %v679, %v688
        %v690 = vlaneseq
        %v691 = vshrl.u32 %v690, 7
        %v692 = vsub.s32 1, %v691
        %v693 = vrot.slane %v679, %v692
        %v696 = vmul.f32 %v683, %v689
        %v697 = vmul.f32 %v683, %v693
        %v698 = vadd.f32 %v673, %v696
        %v699 = vadd.f32 %v675, %v697
        %s700 = scalar_lea.vmem %s2, 1
        %v701 = vld [vmem:[%s700] ss:$8 sm:$0x3]
        %702 = vset.pattern.permute.xlu0 1
        %703 = vperm.xlu0 %702, %v429
        %v704 = vpop.permute.xlu0 %703
        %v707 = vlaneseq
        %v708 = vshrl.u32 %v707, 7
        %v709 = vsub.s32 0, %v708
        %v710 = vrot.slane %v701, %v709
        %v711 = vlaneseq
        %v712 = vshrl.u32 %v711, 7
        %v713 = vsub.s32 1, %v712
        %v714 = vrot.slane %v701, %v713
        %v717 = vmul.f32 %v704, %v710
        %v718 = vmul.f32 %v704, %v714
        %v719 = vadd.f32 %v698, %v717
        %v720 = vadd.f32 %v699, %v718
        %s721 = scalar_lea.vmem %s2, 2
        %v722 = vld [vmem:[%s721] ss:$8 sm:$0x3]
        %723 = vset.pattern.permute.xlu0 2
        %724 = vperm.xlu0 %723, %v429
        %v725 = vpop.permute.xlu0 %724
        %v728 = vlaneseq
        %v729 = vshrl.u32 %v728, 7
        %v730 = vsub.s32 0, %v729
        %v731 = vrot.slane %v722, %v730
        %v732 = vlaneseq
        %v733 = vshrl.u32 %v732, 7
        %v734 = vsub.s32 1, %v733
        %v735 = vrot.slane %v722, %v734
        %v738 = vmul.f32 %v725, %v731
        %v739 = vmul.f32 %v725, %v735
        %v740 = vadd.f32 %v719, %v738
        %v741 = vadd.f32 %v720, %v739
        %s742 = scalar_lea.vmem %s2, 3
        %v743 = vld [vmem:[%s742] ss:$8 sm:$0x3]
        %744 = vset.pattern.permute.xlu0 3
        %745 = vperm.xlu0 %744, %v429
        %v746 = vpop.permute.xlu0 %745
        %v749 = vlaneseq
        %v750 = vshrl.u32 %v749, 7
        %v751 = vsub.s32 0, %v750
        %v752 = vrot.slane %v743, %v751
        %v753 = vlaneseq
        %v754 = vshrl.u32 %v753, 7
        %v755 = vsub.s32 1, %v754
        %v756 = vrot.slane %v743, %v755
        %v759 = vmul.f32 %v746, %v752
        %v760 = vmul.f32 %v746, %v756
        %v761 = vadd.f32 %v740, %v759
        %v762 = vadd.f32 %v741, %v760
        %s763 = scalar_lea.vmem %s2, 4
        %v764 = vld [vmem:[%s763] ss:$8 sm:$0x3]
        %765 = vset.pattern.permute.xlu0 4
        %766 = vperm.xlu0 %765, %v429
        %v767 = vpop.permute.xlu0 %766
        %v770 = vlaneseq
        %v771 = vshrl.u32 %v770, 7
        %v772 = vsub.s32 0, %v771
        %v773 = vrot.slane %v764, %v772
        %v774 = vlaneseq
        %v775 = vshrl.u32 %v774, 7
        %v776 = vsub.s32 1, %v775
        %v777 = vrot.slane %v764, %v776
        %v780 = vmul.f32 %v767, %v773
        %v781 = vmul.f32 %v767, %v777
        %v782 = vadd.f32 %v761, %v780
        %v783 = vadd.f32 %v762, %v781
        %s784 = scalar_lea.vmem %s2, 5
        %v785 = vld [vmem:[%s784] ss:$8 sm:$0x3]
        %786 = vset.pattern.permute.xlu0 5
        %787 = vperm.xlu0 %786, %v429
        %v788 = vpop.permute.xlu0 %787
        %v791 = vlaneseq
        %v792 = vshrl.u32 %v791, 7
        %v793 = vsub.s32 0, %v792
        %v794 = vrot.slane %v785, %v793
        %v795 = vlaneseq
        %v796 = vshrl.u32 %v795, 7
        %v797 = vsub.s32 1, %v796
        %v798 = vrot.slane %v785, %v797
        %v801 = vmul.f32 %v788, %v794
        %v802 = vmul.f32 %v788, %v798
        %v803 = vadd.f32 %v782, %v801
        %v804 = vadd.f32 %v783, %v802
        %s805 = scalar_lea.vmem %s2, 6
        %v806 = vld [vmem:[%s805] ss:$8 sm:$0x3]
        %807 = vset.pattern.permute.xlu0 6
        %808 = vperm.xlu0 %807, %v429
        %v809 = vpop.permute.xlu0 %808
        %v812 = vlaneseq
        %v813 = vshrl.u32 %v812, 7
        %v814 = vsub.s32 0, %v813
        %v815 = vrot.slane %v806, %v814
        %v816 = vlaneseq
        %v817 = vshrl.u32 %v816, 7
        %v818 = vsub.s32 1, %v817
        %v819 = vrot.slane %v806, %v818
        %v822 = vmul.f32 %v809, %v815
        %v823 = vmul.f32 %v809, %v819
        %v824 = vadd.f32 %v803, %v822
        %v825 = vadd.f32 %v804, %v823
        %s826 = scalar_lea.vmem %s2, 7
        %v827 = vld [vmem:[%s826] ss:$8 sm:$0x3]
        %828 = vset.pattern.permute.xlu0 7
        %829 = vperm.xlu0 %828, %v429
        %v830 = vpop.permute.xlu0 %829
        %v833 = vlaneseq
        %v834 = vshrl.u32 %v833, 7
        %v835 = vsub.s32 0, %v834
        %v836 = vrot.slane %v827, %v835
        %v837 = vlaneseq
        %v838 = vshrl.u32 %v837, 7
        %v839 = vsub.s32 1, %v838
        %v840 = vrot.slane %v827, %v839
        %v843 = vmul.f32 %v830, %v836
        %v844 = vmul.f32 %v830, %v840
        %v845 = vadd.f32 %v824, %v843
        %v846 = vadd.f32 %v825, %v844
        %v847 = vmax.f32 %v845, 0.0
        %v848 = vmax.f32 %v846, 0.0
        %s849 = scalar_lea.vmem [#allocation3], 256
        %v850 = vld [vmem:[%s849] sm:$0xff]
        %v851 = vld [vmem:[%s849 + $0x8] sm:$0xff]
        %v852 = vld [vmem:[%s849 + $0x10] sm:$0xff]
        %v853 = vld [vmem:[%s849 + $0x18] sm:$0xff]
        %v854 = vld [vmem:[%s849 + $0x20] sm:$0xff]
        %v855 = vld [vmem:[%s849 + $0x28] sm:$0xff]
        %v856 = vld [vmem:[%s849 + $0x30] sm:$0xff]
        %v857 = vld [vmem:[%s849 + $0x38] sm:$0xff]
        %v858 = vld [vmem:[%s849 + $0x40] sm:$0xff]
        %v859 = vld [vmem:[%s849 + $0x48] sm:$0xff]
        %v860 = vld [vmem:[%s849 + $0x50] sm:$0xff]
        %v861 = vld [vmem:[%s849 + $0x58] sm:$0xff]
        %v862 = vld [vmem:[%s849 + $0x60] sm:$0xff]
        %v863 = vld [vmem:[%s849 + $0x68] sm:$0xff]
        %v864 = vld [vmem:[%s849 + $0x70] sm:$0xff]
        %v865 = vld [vmem:[%s849 + $0x78] sm:$0xff]
        %v866 = vld [vmem:[%s849 + $0x80] sm:$0xff]
        %v867 = vld [vmem:[%s849 + $0x88] sm:$0xff]
        %v868 = vld [vmem:[%s849 + $0x90] sm:$0xff]
        %v869 = vld [vmem:[%s849 + $0x98] sm:$0xff]
        %v870 = vld [vmem:[%s849 + $0xa0] sm:$0xff]
        %v871 = vld [vmem:[%s849 + $0xa8] sm:$0xff]
        %v872 = vld [vmem:[%s849 + $0xb0] sm:$0xff]
        %v873 = vld [vmem:[%s849 + $0xb8] sm:$0xff]
        %v874 = vld [vmem:[%s849 + $0xc0] sm:$0xff]
        %v875 = vld [vmem:[%s849 + $0xc8] sm:$0xff]
        %v876 = vld [vmem:[%s849 + $0xd0] sm:$0xff]
        %v877 = vld [vmem:[%s849 + $0xd8] sm:$0xff]
        %v878 = vld [vmem:[%s849 + $0xe0] sm:$0xff]
        %v879 = vld [vmem:[%s849 + $0xe8] sm:$0xff]
        %v880 = vld [vmem:[%s849 + $0xf0] sm:$0xff]
        %v881 = vld [vmem:[%s849 + $0xf8] sm:$0xff]
        %v882 = vpack.c.bf16 %v847, %v847
        %v883 = vpack.c.bf16 %v848, %v848
        %s884 = scalar_lea.vmem %s6, 1
        %v885 = vld [vmem:[%s884] ss:$8 sm:$0x3]
        %v887 = vlaneseq
        %v888 = vshrl.u32 %v887, 7
        %v889 = vsub.s32 0, %v888
        %v890 = vrot.slane %v885, %v889
        %v891 = vlaneseq
        %v892 = vshrl.u32 %v891, 7
        %v893 = vsub.s32 1, %v892
        %v894 = vrot.slane %v885, %v893
        %v929 = vunpack.c.l.b16 %v850
        %v930 = vunpack.c.h.b16 %v850
        %v931 = vunpack.c.l.b16 %v851
        %v932 = vunpack.c.h.b16 %v851
        %v933 = vunpack.c.l.b16 %v852
        %v934 = vunpack.c.h.b16 %v852
        %v935 = vunpack.c.l.b16 %v853
        %v936 = vunpack.c.h.b16 %v853
        %v937 = vunpack.c.l.b16 %v854
        %v938 = vunpack.c.h.b16 %v854
        %v939 = vunpack.c.l.b16 %v855
        %v940 = vunpack.c.h.b16 %v855
        %v941 = vunpack.c.l.b16 %v856
        %v942 = vunpack.c.h.b16 %v856
        %v943 = vunpack.c.l.b16 %v857
        %v944 = vunpack.c.h.b16 %v857
        %v945 = vunpack.c.l.b16 %v858
        %v946 = vunpack.c.h.b16 %v858
        %v947 = vunpack.c.l.b16 %v859
        %v948 = vunpack.c.h.b16 %v859
        %v949 = vunpack.c.l.b16 %v860
        %v950 = vunpack.c.h.b16 %v860
        %v951 = vunpack.c.l.b16 %v861
        %v952 = vunpack.c.h.b16 %v861
        %v953 = vunpack.c.l.b16 %v862
        %v954 = vunpack.c.h.b16 %v862
        %v955 = vunpack.c.l.b16 %v863
        %v956 = vunpack.c.h.b16 %v863
        %v957 = vunpack.c.l.b16 %v864
        %v958 = vunpack.c.h.b16 %v864
        %v959 = vunpack.c.l.b16 %v865
        %v960 = vunpack.c.h.b16 %v865
        %v961 = vunpack.c.l.b16 %v866
        %v962 = vunpack.c.h.b16 %v866
        %v963 = vunpack.c.l.b16 %v867
        %v964 = vunpack.c.h.b16 %v867
        %v965 = vunpack.c.l.b16 %v868
        %v966 = vunpack.c.h.b16 %v868
        %v967 = vunpack.c.l.b16 %v869
        %v968 = vunpack.c.h.b16 %v869
        %v969 = vunpack.c.l.b16 %v870
        %v970 = vunpack.c.h.b16 %v870
        %v971 = vunpack.c.l.b16 %v871
        %v972 = vunpack.c.h.b16 %v871
        %v973 = vunpack.c.l.b16 %v872
        %v974 = vunpack.c.h.b16 %v872
        %v975 = vunpack.c.l.b16 %v873
        %v976 = vunpack.c.h.b16 %v873
        %v977 = vunpack.c.l.b16 %v874
        %v978 = vunpack.c.h.b16 %v874
        %v979 = vunpack.c.l.b16 %v875
        %v980 = vunpack.c.h.b16 %v875
        %v981 = vunpack.c.l.b16 %v876
        %v982 = vunpack.c.h.b16 %v876
        %v983 = vunpack.c.l.b16 %v877
        %v984 = vunpack.c.h.b16 %v877
        %v985 = vunpack.c.l.b16 %v878
        %v986 = vunpack.c.h.b16 %v878
        %v987 = vunpack.c.l.b16 %v879
        %v988 = vunpack.c.h.b16 %v879
        %v989 = vunpack.c.l.b16 %v880
        %v990 = vunpack.c.h.b16 %v880
        %v991 = vunpack.c.l.b16 %v881
        %v992 = vunpack.c.h.b16 %v881
        %v993 = vpack.c.b16 %v931, %v929
        %v994 = vpack.c.b16 %v932, %v930
        %v995 = vpack.c.b16 %v935, %v933
        %v996 = vpack.c.b16 %v936, %v934
        %v997 = vpack.c.b16 %v939, %v937
        %v998 = vpack.c.b16 %v940, %v938
        %v999 = vpack.c.b16 %v943, %v941
        %v1000 = vpack.c.b16 %v944, %v942
        %v1001 = vpack.c.b16 %v947, %v945
        %v1002 = vpack.c.b16 %v948, %v946
        %v1003 = vpack.c.b16 %v951, %v949
        %v1004 = vpack.c.b16 %v952, %v950
        %v1005 = vpack.c.b16 %v955, %v953
        %v1006 = vpack.c.b16 %v956, %v954
        %v1007 = vpack.c.b16 %v959, %v957
        %v1008 = vpack.c.b16 %v960, %v958
        %v1009 = vpack.c.b16 %v963, %v961
        %v1010 = vpack.c.b16 %v964, %v962
        %v1011 = vpack.c.b16 %v967, %v965
        %v1012 = vpack.c.b16 %v968, %v966
        %v1013 = vpack.c.b16 %v971, %v969
        %v1014 = vpack.c.b16 %v972, %v970
        %v1015 = vpack.c.b16 %v975, %v973
        %v1016 = vpack.c.b16 %v976, %v974
        %v1017 = vpack.c.b16 %v979, %v977
        %v1018 = vpack.c.b16 %v980, %v978
        %v1019 = vpack.c.b16 %v983, %v981
        %v1020 = vpack.c.b16 %v984, %v982
        %v1021 = vpack.c.b16 %v987, %v985
        %v1022 = vpack.c.b16 %v988, %v986
        %v1023 = vpack.c.b16 %v991, %v989
        %v1024 = vpack.c.b16 %v992, %v990
        %1057 = vmatprep.subr.bf16.mxu0 %v1008
        %1058 = vmatpush1.bf16.msra.mxu0 %v1007
        %1059 = vmatprep.subr.bf16.mxu0 %v1006
        %1060 = vmatpush1.bf16.msra.mxu0 %v1005
        %1061 = vmatprep.subr.bf16.mxu0 %v1004
        %1062 = vmatpush1.bf16.msra.mxu0 %v1003
        %1063 = vmatprep.subr.bf16.mxu0 %v1002
        %1064 = vmatpush1.bf16.msra.mxu0 %v1001
        %1065 = vmatprep.subr.bf16.mxu0 %v1000
        %1066 = vmatpush1.bf16.msra.mxu0 %v999
        %1067 = vmatprep.subr.bf16.mxu0 %v998
        %1068 = vmatpush1.bf16.msra.mxu0 %v997
        %1069 = vmatprep.subr.bf16.mxu0 %v996
        %1070 = vmatpush1.bf16.msra.mxu0 %v995
        %1071 = vmatprep.subr.bf16.mxu0 %v994
        %1072 = vmatpush1.bf16.msra.mxu0 %v993
        %1073 = vmatprep.subr.bf16.mxu0 %v1024
        %1074 = vmatpush2.bf16.msra.mxu0 %v1023
        %1075 = vmatprep.subr.bf16.mxu0 %v1022
        %1076 = vmatpush2.bf16.msra.mxu0 %v1021
        %1077 = vmatprep.subr.bf16.mxu0 %v1020
        %1078 = vmatpush2.bf16.msra.mxu0 %v1019
        %1079 = vmatprep.subr.bf16.mxu0 %v1018
        %1080 = vmatpush2.bf16.msra.mxu0 %v1017
        %1081 = vmatprep.subr.bf16.mxu0 %v1016
        %1082 = vmatpush2.bf16.msra.mxu0 %v1015
        %1083 = vmatprep.subr.bf16.mxu0 %v1014
        %1084 = vmatpush2.bf16.msra.mxu0 %v1013
        %1085 = vmatprep.subr.bf16.mxu0 %v1012
        %1086 = vmatpush2.bf16.msra.mxu0 %v1011
        %1087 = vmatprep.subr.bf16.mxu0 %v1010
        %1088 = vmatpush2.bf16.msra.mxu0 %v1009
        %1089 = vmatprep.mubr.bf16.mxu0 %v883
        %1090 = vmatmul.mubr.bf16.gmra.mxu0 %v882
        %v1091 = vpop.f32.mrf.mxu0
        %v1092 = vadd.f32 %v890, %v1091
        %v1093 = vpop.f32.mrf.mxu0
        %v1094 = vadd.f32 %v894, %v1093
        %v1095 = vpop.f32.mrf.mxu0
        %v1096 = vpop.f32.mrf.mxu0
        %1097 = vdwg.mxu0
        %v1098 = vmax.f32 %v1092, 0.0
        %v1099 = vmax.f32 %v1094, 0.0
        %s1100 = scalar_lea.vmem [#allocation3], 512
        %v1101 = vld [vmem:[%s1100] sm:$0xff]
        %v1102 = vld [vmem:[%s1100 + $0x8] sm:$0xff]
        %v1103 = vld [vmem:[%s1100 + $0x10] sm:$0xff]
        %v1104 = vld [vmem:[%s1100 + $0x18] sm:$0xff]
        %v1105 = vld [vmem:[%s1100 + $0x20] sm:$0xff]
        %v1106 = vld [vmem:[%s1100 + $0x28] sm:$0xff]
        %v1107 = vld [vmem:[%s1100 + $0x30] sm:$0xff]
        %v1108 = vld [vmem:[%s1100 + $0x38] sm:$0xff]
        %v1109 = vld [vmem:[%s1100 + $0x40] sm:$0xff]
        %v1110 = vld [vmem:[%s1100 + $0x48] sm:$0xff]
        %v1111 = vld [vmem:[%s1100 + $0x50] sm:$0xff]
        %v1112 = vld [vmem:[%s1100 + $0x58] sm:$0xff]
        %v1113 = vld [vmem:[%s1100 + $0x60] sm:$0xff]
        %v1114 = vld [vmem:[%s1100 + $0x68] sm:$0xff]
        %v1115 = vld [vmem:[%s1100 + $0x70] sm:$0xff]
        %v1116 = vld [vmem:[%s1100 + $0x78] sm:$0xff]
        %v1117 = vld [vmem:[%s1100 + $0x80] sm:$0xff]
        %v1118 = vld [vmem:[%s1100 + $0x88] sm:$0xff]
        %v1119 = vld [vmem:[%s1100 + $0x90] sm:$0xff]
        %v1120 = vld [vmem:[%s1100 + $0x98] sm:$0xff]
        %v1121 = vld [vmem:[%s1100 + $0xa0] sm:$0xff]
        %v1122 = vld [vmem:[%s1100 + $0xa8] sm:$0xff]
        %v1123 = vld [vmem:[%s1100 + $0xb0] sm:$0xff]
        %v1124 = vld [vmem:[%s1100 + $0xb8] sm:$0xff]
        %v1125 = vld [vmem:[%s1100 + $0xc0] sm:$0xff]
        %v1126 = vld [vmem:[%s1100 + $0xc8] sm:$0xff]
        %v1127 = vld [vmem:[%s1100 + $0xd0] sm:$0xff]
        %v1128 = vld [vmem:[%s1100 + $0xd8] sm:$0xff]
        %v1129 = vld [vmem:[%s1100 + $0xe0] sm:$0xff]
        %v1130 = vld [vmem:[%s1100 + $0xe8] sm:$0xff]
        %v1131 = vld [vmem:[%s1100 + $0xf0] sm:$0xff]
        %v1132 = vld [vmem:[%s1100 + $0xf8] sm:$0xff]
        %v1133 = vpack.c.bf16 %v1098, %v1098
        %v1134 = vpack.c.bf16 %v1099, %v1099
        %s1135 = scalar_lea.vmem %s6, 2
        %v1136 = vld [vmem:[%s1135] ss:$8 sm:$0x3]
        %v1138 = vlaneseq
        %v1139 = vshrl.u32 %v1138, 7
        %v1140 = vsub.s32 0, %v1139
        %v1141 = vrot.slane %v1136, %v1140
        %v1142 = vlaneseq
        %v1143 = vshrl.u32 %v1142, 7
        %v1144 = vsub.s32 1, %v1143
        %v1145 = vrot.slane %v1136, %v1144
        %v1180 = vunpack.c.l.b16 %v1101
        %v1181 = vunpack.c.h.b16 %v1101
        %v1182 = vunpack.c.l.b16 %v1102
        %v1183 = vunpack.c.h.b16 %v1102
        %v1184 = vunpack.c.l.b16 %v1103
        %v1185 = vunpack.c.h.b16 %v1103
        %v1186 = vunpack.c.l.b16 %v1104
        %v1187 = vunpack.c.h.b16 %v1104
        %v1188 = vunpack.c.l.b16 %v1105
        %v1189 = vunpack.c.h.b16 %v1105
        %v1190 = vunpack.c.l.b16 %v1106
        %v1191 = vunpack.c.h.b16 %v1106
        %v1192 = vunpack.c.l.b16 %v1107
        %v1193 = vunpack.c.h.b16 %v1107
        %v1194 = vunpack.c.l.b16 %v1108
        %v1195 = vunpack.c.h.b16 %v1108
        %v1196 = vunpack.c.l.b16 %v1109
        %v1197 = vunpack.c.h.b16 %v1109
        %v1198 = vunpack.c.l.b16 %v1110
        %v1199 = vunpack.c.h.b16 %v1110
        %v1200 = vunpack.c.l.b16 %v1111
        %v1201 = vunpack.c.h.b16 %v1111
        %v1202 = vunpack.c.l.b16 %v1112
        %v1203 = vunpack.c.h.b16 %v1112
        %v1204 = vunpack.c.l.b16 %v1113
        %v1205 = vunpack.c.h.b16 %v1113
        %v1206 = vunpack.c.l.b16 %v1114
        %v1207 = vunpack.c.h.b16 %v1114
        %v1208 = vunpack.c.l.b16 %v1115
        %v1209 = vunpack.c.h.b16 %v1115
        %v1210 = vunpack.c.l.b16 %v1116
        %v1211 = vunpack.c.h.b16 %v1116
        %v1212 = vunpack.c.l.b16 %v1117
        %v1213 = vunpack.c.h.b16 %v1117
        %v1214 = vunpack.c.l.b16 %v1118
        %v1215 = vunpack.c.h.b16 %v1118
        %v1216 = vunpack.c.l.b16 %v1119
        %v1217 = vunpack.c.h.b16 %v1119
        %v1218 = vunpack.c.l.b16 %v1120
        %v1219 = vunpack.c.h.b16 %v1120
        %v1220 = vunpack.c.l.b16 %v1121
        %v1221 = vunpack.c.h.b16 %v1121
        %v1222 = vunpack.c.l.b16 %v1122
        %v1223 = vunpack.c.h.b16 %v1122
        %v1224 = vunpack.c.l.b16 %v1123
        %v1225 = vunpack.c.h.b16 %v1123
        %v1226 = vunpack.c.l.b16 %v1124
        %v1227 = vunpack.c.h.b16 %v1124
        %v1228 = vunpack.c.l.b16 %v1125
        %v1229 = vunpack.c.h.b16 %v1125
        %v1230 = vunpack.c.l.b16 %v1126
        %v1231 = vunpack.c.h.b16 %v1126
        %v1232 = vunpack.c.l.b16 %v1127
        %v1233 = vunpack.c.h.b16 %v1127
        %v1234 = vunpack.c.l.b16 %v1128
        %v1235 = vunpack.c.h.b16 %v1128
        %v1236 = vunpack.c.l.b16 %v1129
        %v1237 = vunpack.c.h.b16 %v1129
        %v1238 = vunpack.c.l.b16 %v1130
        %v1239 = vunpack.c.h.b16 %v1130
        %v1240 = vunpack.c.l.b16 %v1131
        %v1241 = vunpack.c.h.b16 %v1131
        %v1242 = vunpack.c.l.b16 %v1132
        %v1243 = vunpack.c.h.b16 %v1132
        %v1244 = vpack.c.b16 %v1182, %v1180
        %v1245 = vpack.c.b16 %v1183, %v1181
        %v1246 = vpack.c.b16 %v1186, %v1184
        %v1247 = vpack.c.b16 %v1187, %v1185
        %v1248 = vpack.c.b16 %v1190, %v1188
        %v1249 = vpack.c.b16 %v1191, %v1189
        %v1250 = vpack.c.b16 %v1194, %v1192
        %v1251 = vpack.c.b16 %v1195, %v1193
        %v1252 = vpack.c.b16 %v1198, %v1196
        %v1253 = vpack.c.b16 %v1199, %v1197
        %v1254 = vpack.c.b16 %v1202, %v1200
        %v1255 = vpack.c.b16 %v1203, %v1201
        %v1256 = vpack.c.b16 %v1206, %v1204
        %v1257 = vpack.c.b16 %v1207, %v1205
        %v1258 = vpack.c.b16 %v1210, %v1208
        %v1259 = vpack.c.b16 %v1211, %v1209
        %v1260 = vpack.c.b16 %v1214, %v1212
        %v1261 = vpack.c.b16 %v1215, %v1213
        %v1262 = vpack.c.b16 %v1218, %v1216
        %v1263 = vpack.c.b16 %v1219, %v1217
        %v1264 = vpack.c.b16 %v1222, %v1220
        %v1265 = vpack.c.b16 %v1223, %v1221
        %v1266 = vpack.c.b16 %v1226, %v1224
        %v1267 = vpack.c.b16 %v1227, %v1225
        %v1268 = vpack.c.b16 %v1230, %v1228
        %v1269 = vpack.c.b16 %v1231, %v1229
        %v1270 = vpack.c.b16 %v1234, %v1232
        %v1271 = vpack.c.b16 %v1235, %v1233
        %v1272 = vpack.c.b16 %v1238, %v1236
        %v1273 = vpack.c.b16 %v1239, %v1237
        %v1274 = vpack.c.b16 %v1242, %v1240
        %v1275 = vpack.c.b16 %v1243, %v1241
        %1308 = vmatprep.subr.bf16.mxu0 %v1259
        %1309 = vmatpush1.bf16.msra.mxu0 %v1258
        %1310 = vmatprep.subr.bf16.mxu0 %v1257
        %1311 = vmatpush1.bf16.msra.mxu0 %v1256
        %1312 = vmatprep.subr.bf16.mxu0 %v1255
        %1313 = vmatpush1.bf16.msra.mxu0 %v1254
        %1314 = vmatprep.subr.bf16.mxu0 %v1253
        %1315 = vmatpush1.bf16.msra.mxu0 %v1252
        %1316 = vmatprep.subr.bf16.mxu0 %v1251
        %1317 = vmatpush1.bf16.msra.mxu0 %v1250
        %1318 = vmatprep.subr.bf16.mxu0 %v1249
        %1319 = vmatpush1.bf16.msra.mxu0 %v1248
        %1320 = vmatprep.subr.bf16.mxu0 %v1247
        %1321 = vmatpush1.bf16.msra.mxu0 %v1246
        %1322 = vmatprep.subr.bf16.mxu0 %v1245
        %1323 = vmatpush1.bf16.msra.mxu0 %v1244
        %1324 = vmatprep.subr.bf16.mxu0 %v1275
        %1325 = vmatpush2.bf16.msra.mxu0 %v1274
        %1326 = vmatprep.subr.bf16.mxu0 %v1273
        %1327 = vmatpush2.bf16.msra.mxu0 %v1272
        %1328 = vmatprep.subr.bf16.mxu0 %v1271
        %1329 = vmatpush2.bf16.msra.mxu0 %v1270
        %1330 = vmatprep.subr.bf16.mxu0 %v1269
        %1331 = vmatpush2.bf16.msra.mxu0 %v1268
        %1332 = vmatprep.subr.bf16.mxu0 %v1267
        %1333 = vmatpush2.bf16.msra.mxu0 %v1266
        %1334 = vmatprep.subr.bf16.mxu0 %v1265
        %1335 = vmatpush2.bf16.msra.mxu0 %v1264
        %1336 = vmatprep.subr.bf16.mxu0 %v1263
        %1337 = vmatpush2.bf16.msra.mxu0 %v1262
        %1338 = vmatprep.subr.bf16.mxu0 %v1261
        %1339 = vmatpush2.bf16.msra.mxu0 %v1260
        %1340 = vmatprep.mubr.bf16.mxu0 %v1134
        %1341 = vmatmul.mubr.bf16.gmra.mxu0 %v1133
        %v1342 = vpop.f32.mrf.mxu0
        %v1343 = vadd.f32 %v1141, %v1342
        %v1344 = vpop.f32.mrf.mxu0
        %v1345 = vadd.f32 %v1145, %v1344
        %v1346 = vpop.f32.mrf.mxu0
        %v1347 = vpop.f32.mrf.mxu0
        %1348 = vdwg.mxu0
        %1349 = vst [vmem:[%s404] sm:$0xff] %v1343
        %1350 = vst [vmem:[%s404 + $0x8] sm:$0xff] %v1345
        %v1351 = vld [vmem:[#allocation6] sm:$0xff]
        %v1352 = vld [vmem:[#allocation6 + $0x8] sm:$0xff]
        %v1353 = vld [vmem:[#allocation6 + $0x10] sm:$0xff]
        %v1354 = vld [vmem:[#allocation6 + $0x18] sm:$0xff]
        %v1355 = vld [vmem:[#allocation6 + $0x20] sm:$0xff]
        %v1356 = vld [vmem:[#allocation6 + $0x28] sm:$0xff]
        %v1357 = vld [vmem:[#allocation6 + $0x30] sm:$0xff]
        %v1358 = vld [vmem:[#allocation6 + $0x38] sm:$0xff]
        %v1359 = vld [vmem:[#allocation6 + $0x40] sm:$0xff]
        %v1360 = vld [vmem:[#allocation6 + $0x48] sm:$0xff]
        %v1361 = vld [vmem:[#allocation6 + $0x50] sm:$0xff]
        %v1362 = vld [vmem:[#allocation6 + $0x58] sm:$0xff]
        %v1363 = vld [vmem:[#allocation6 + $0x60] sm:$0xff]
        %v1364 = vld [vmem:[#allocation6 + $0x68] sm:$0xff]
        %v1365 = vld [vmem:[#allocation6 + $0x70] sm:$0xff]
        %v1366 = vld [vmem:[#allocation6 + $0x78] sm:$0xff]
        %v1367 = vld [vmem:[#allocation6 + $0x80] sm:$0xff]
        %v1368 = vld [vmem:[#allocation6 + $0x88] sm:$0xff]
        %v1369 = vld [vmem:[#allocation6 + $0x90] sm:$0xff]
        %v1370 = vld [vmem:[#allocation6 + $0x98] sm:$0xff]
        %v1371 = vld [vmem:[#allocation6 + $0xa0] sm:$0xff]
        %v1372 = vld [vmem:[#allocation6 + $0xa8] sm:$0xff]
        %v1373 = vld [vmem:[#allocation6 + $0xb0] sm:$0xff]
        %v1374 = vld [vmem:[#allocation6 + $0xb8] sm:$0xff]
        %v1375 = vld [vmem:[#allocation6 + $0xc0] sm:$0xff]
        %v1376 = vld [vmem:[#allocation6 + $0xc8] sm:$0xff]
        %v1377 = vld [vmem:[#allocation6 + $0xd0] sm:$0xff]
        %v1378 = vld [vmem:[#allocation6 + $0xd8] sm:$0xff]
        %v1379 = vld [vmem:[#allocation6 + $0xe0] sm:$0xff]
        %v1380 = vld [vmem:[#allocation6 + $0xe8] sm:$0xff]
        %v1381 = vld [vmem:[#allocation6 + $0xf0] sm:$0xff]
        %v1382 = vld [vmem:[#allocation6 + $0xf8] sm:$0xff]
        %v1383 = vld [vmem:[#allocation6 + $0x100] sm:$0xff]
        %v1384 = vld [vmem:[#allocation6 + $0x108] sm:$0xff]
        %v1385 = vld [vmem:[#allocation6 + $0x110] sm:$0xff]
        %v1386 = vld [vmem:[#allocation6 + $0x118] sm:$0xff]
        %v1387 = vld [vmem:[#allocation6 + $0x120] sm:$0xff]
        %v1388 = vld [vmem:[#allocation6 + $0x128] sm:$0xff]
        %v1389 = vld [vmem:[#allocation6 + $0x130] sm:$0xff]
        %v1390 = vld [vmem:[#allocation6 + $0x138] sm:$0xff]
        %v1391 = vld [vmem:[#allocation6 + $0x140] sm:$0xff]
        %v1392 = vld [vmem:[#allocation6 + $0x148] sm:$0xff]
        %v1393 = vld [vmem:[#allocation6 + $0x150] sm:$0xff]
        %v1394 = vld [vmem:[#allocation6 + $0x158] sm:$0xff]
        %v1395 = vld [vmem:[#allocation6 + $0x160] sm:$0xff]
        %v1396 = vld [vmem:[#allocation6 + $0x168] sm:$0xff]
        %v1397 = vld [vmem:[#allocation6 + $0x170] sm:$0xff]
        %v1398 = vld [vmem:[#allocation6 + $0x178] sm:$0xff]
        %v1399 = vld [vmem:[#allocation6 + $0x180] sm:$0xff]
        %v1400 = vld [vmem:[#allocation6 + $0x188] sm:$0xff]
        %v1401 = vld [vmem:[#allocation6 + $0x190] sm:$0xff]
        %v1402 = vld [vmem:[#allocation6 + $0x198] sm:$0xff]
        %v1403 = vld [vmem:[#allocation6 + $0x1a0] sm:$0xff]
        %v1404 = vld [vmem:[#allocation6 + $0x1a8] sm:$0xff]
        %v1405 = vld [vmem:[#allocation6 + $0x1b0] sm:$0xff]
        %v1406 = vld [vmem:[#allocation6 + $0x1b8] sm:$0xff]
        %v1407 = vld [vmem:[#allocation6 + $0x1c0] sm:$0xff]
        %v1408 = vld [vmem:[#allocation6 + $0x1c8] sm:$0xff]
        %v1409 = vld [vmem:[#allocation6 + $0x1d0] sm:$0xff]
        %v1410 = vld [vmem:[#allocation6 + $0x1d8] sm:$0xff]
        %v1411 = vld [vmem:[#allocation6 + $0x1e0] sm:$0xff]
        %v1412 = vld [vmem:[#allocation6 + $0x1e8] sm:$0xff]
        %v1413 = vld [vmem:[#allocation6 + $0x1f0] sm:$0xff]
        %v1414 = vld [vmem:[#allocation6 + $0x1f8] sm:$0xff]
        %v1415 = vpack.c.bf16 %v1343, %v1343
        %v1416 = vpack.c.bf16 %v1345, %v1345
        %v1417 = vld [vmem:[%s7] sm:$0xf]
        %v1419 = vlaneseq
        %v1420 = vshrl.u32 %v1419, 7
        %v1421 = vsub.s32 0, %v1420
        %v1422 = vrot.slane %v1417, %v1421
        %v1423 = vlaneseq
        %v1424 = vshrl.u32 %v1423, 7
        %v1425 = vsub.s32 1, %v1424
        %v1426 = vrot.slane %v1417, %v1425
        %v1427 = vlaneseq
        %v1428 = vshrl.u32 %v1427, 7
        %v1429 = vsub.s32 2, %v1428
        %v1430 = vrot.slane %v1417, %v1429
        %v1431 = vlaneseq
        %v1432 = vshrl.u32 %v1431, 7
        %v1433 = vsub.s32 3, %v1432
        %v1434 = vrot.slane %v1417, %v1433
        %v1503 = vunpack.c.l.b16 %v1351
        %v1504 = vunpack.c.h.b16 %v1351
        %v1505 = vunpack.c.l.b16 %v1352
        %v1506 = vunpack.c.h.b16 %v1352
        %v1507 = vunpack.c.l.b16 %v1353
        %v1508 = vunpack.c.h.b16 %v1353
        %v1509 = vunpack.c.l.b16 %v1354
        %v1510 = vunpack.c.h.b16 %v1354
        %v1511 = vunpack.c.l.b16 %v1355
        %v1512 = vunpack.c.h.b16 %v1355
        %v1513 = vunpack.c.l.b16 %v1356
        %v1514 = vunpack.c.h.b16 %v1356
        %v1515 = vunpack.c.l.b16 %v1357
        %v1516 = vunpack.c.h.b16 %v1357
        %v1517 = vunpack.c.l.b16 %v1358
        %v1518 = vunpack.c.h.b16 %v1358
        %v1519 = vunpack.c.l.b16 %v1359
        %v1520 = vunpack.c.h.b16 %v1359
        %v1521 = vunpack.c.l.b16 %v1360
        %v1522 = vunpack.c.h.b16 %v1360
        %v1523 = vunpack.c.l.b16 %v1361
        %v1524 = vunpack.c.h.b16 %v1361
        %v1525 = vunpack.c.l.b16 %v1362
        %v1526 = vunpack.c.h.b16 %v1362
        %v1527 = vunpack.c.l.b16 %v1363
        %v1528 = vunpack.c.h.b16 %v1363
        %v1529 = vunpack.c.l.b16 %v1364
        %v1530 = vunpack.c.h.b16 %v1364
        %v1531 = vunpack.c.l.b16 %v1365
        %v1532 = vunpack.c.h.b16 %v1365
        %v1533 = vunpack.c.l.b16 %v1366
        %v1534 = vunpack.c.h.b16 %v1366
        %v1535 = vunpack.c.l.b16 %v1367
        %v1536 = vunpack.c.h.b16 %v1367
        %v1537 = vunpack.c.l.b16 %v1368
        %v1538 = vunpack.c.h.b16 %v1368
        %v1539 = vunpack.c.l.b16 %v1369
        %v1540 = vunpack.c.h.b16 %v1369
        %v1541 = vunpack.c.l.b16 %v1370
        %v1542 = vunpack.c.h.b16 %v1370
        %v1543 = vunpack.c.l.b16 %v1371
        %v1544 = vunpack.c.h.b16 %v1371
        %v1545 = vunpack.c.l.b16 %v1372
        %v1546 = vunpack.c.h.b16 %v1372
        %v1547 = vunpack.c.l.b16 %v1373
        %v1548 = vunpack.c.h.b16 %v1373
        %v1549 = vunpack.c.l.b16 %v1374
        %v1550 = vunpack.c.h.b16 %v1374
        %v1551 = vunpack.c.l.b16 %v1375
        %v1552 = vunpack.c.h.b16 %v1375
        %v1553 = vunpack.c.l.b16 %v1376
        %v1554 = vunpack.c.h.b16 %v1376
        %v1555 = vunpack.c.l.b16 %v1377
        %v1556 = vunpack.c.h.b16 %v1377
        %v1557 = vunpack.c.l.b16 %v1378
        %v1558 = vunpack.c.h.b16 %v1378
        %v1559 = vunpack.c.l.b16 %v1379
        %v1560 = vunpack.c.h.b16 %v1379
        %v1561 = vunpack.c.l.b16 %v1380
        %v1562 = vunpack.c.h.b16 %v1380
        %v1563 = vunpack.c.l.b16 %v1381
        %v1564 = vunpack.c.h.b16 %v1381
        %v1565 = vunpack.c.l.b16 %v1382
        %v1566 = vunpack.c.h.b16 %v1382
        %v1567 = vunpack.c.l.b16 %v1383
        %v1568 = vunpack.c.h.b16 %v1383
        %v1569 = vunpack.c.l.b16 %v1384
        %v1570 = vunpack.c.h.b16 %v1384
        %v1571 = vunpack.c.l.b16 %v1385
        %v1572 = vunpack.c.h.b16 %v1385
        %v1573 = vunpack.c.l.b16 %v1386
        %v1574 = vunpack.c.h.b16 %v1386
        %v1575 = vunpack.c.l.b16 %v1387
        %v1576 = vunpack.c.h.b16 %v1387
        %v1577 = vunpack.c.l.b16 %v1388
        %v1578 = vunpack.c.h.b16 %v1388
        %v1579 = vunpack.c.l.b16 %v1389
        %v1580 = vunpack.c.h.b16 %v1389
        %v1581 = vunpack.c.l.b16 %v1390
        %v1582 = vunpack.c.h.b16 %v1390
        %v1583 = vunpack.c.l.b16 %v1391
        %v1584 = vunpack.c.h.b16 %v1391
        %v1585 = vunpack.c.l.b16 %v1392
        %v1586 = vunpack.c.h.b16 %v1392
        %v1587 = vunpack.c.l.b16 %v1393
        %v1588 = vunpack.c.h.b16 %v1393
        %v1589 = vunpack.c.l.b16 %v1394
        %v1590 = vunpack.c.h.b16 %v1394
        %v1591 = vunpack.c.l.b16 %v1395
        %v1592 = vunpack.c.h.b16 %v1395
        %v1593 = vunpack.c.l.b16 %v1396
        %v1594 = vunpack.c.h.b16 %v1396
        %v1595 = vunpack.c.l.b16 %v1397
        %v1596 = vunpack.c.h.b16 %v1397
        %v1597 = vunpack.c.l.b16 %v1398
        %v1598 = vunpack.c.h.b16 %v1398
        %v1599 = vunpack.c.l.b16 %v1399
        %v1600 = vunpack.c.h.b16 %v1399
        %v1601 = vunpack.c.l.b16 %v1400
        %v1602 = vunpack.c.h.b16 %v1400
        %v1603 = vunpack.c.l.b16 %v1401
        %v1604 = vunpack.c.h.b16 %v1401
        %v1605 = vunpack.c.l.b16 %v1402
        %v1606 = vunpack.c.h.b16 %v1402
        %v1607 = vunpack.c.l.b16 %v1403
        %v1608 = vunpack.c.h.b16 %v1403
        %v1609 = vunpack.c.l.b16 %v1404
        %v1610 = vunpack.c.h.b16 %v1404
        %v1611 = vunpack.c.l.b16 %v1405
        %v1612 = vunpack.c.h.b16 %v1405
        %v1613 = vunpack.c.l.b16 %v1406
        %v1614 = vunpack.c.h.b16 %v1406
        %v1615 = vunpack.c.l.b16 %v1407
        %v1616 = vunpack.c.h.b16 %v1407
        %v1617 = vunpack.c.l.b16 %v1408
        %v1618 = vunpack.c.h.b16 %v1408
        %v1619 = vunpack.c.l.b16 %v1409
        %v1620 = vunpack.c.h.b16 %v1409
        %v1621 = vunpack.c.l.b16 %v1410
        %v1622 = vunpack.c.h.b16 %v1410
        %v1623 = vunpack.c.l.b16 %v1411
        %v1624 = vunpack.c.h.b16 %v1411
        %v1625 = vunpack.c.l.b16 %v1412
        %v1626 = vunpack.c.h.b16 %v1412
        %v1627 = vunpack.c.l.b16 %v1413
        %v1628 = vunpack.c.h.b16 %v1413
        %v1629 = vunpack.c.l.b16 %v1414
        %v1630 = vunpack.c.h.b16 %v1414
        %v1631 = vpack.c.b16 %v1507, %v1503
        %v1632 = vpack.c.b16 %v1508, %v1504
        %v1633 = vpack.c.b16 %v1509, %v1505
        %v1634 = vpack.c.b16 %v1510, %v1506
        %v1635 = vpack.c.b16 %v1515, %v1511
        %v1636 = vpack.c.b16 %v1516, %v1512
        %v1637 = vpack.c.b16 %v1517, %v1513
        %v1638 = vpack.c.b16 %v1518, %v1514
        %v1639 = vpack.c.b16 %v1523, %v1519
        %v1640 = vpack.c.b16 %v1524, %v1520
        %v1641 = vpack.c.b16 %v1525, %v1521
        %v1642 = vpack.c.b16 %v1526, %v1522
        %v1643 = vpack.c.b16 %v1531, %v1527
        %v1644 = vpack.c.b16 %v1532, %v1528
        %v1645 = vpack.c.b16 %v1533, %v1529
        %v1646 = vpack.c.b16 %v1534, %v1530
        %v1647 = vpack.c.b16 %v1539, %v1535
        %v1648 = vpack.c.b16 %v1540, %v1536
        %v1649 = vpack.c.b16 %v1541, %v1537
        %v1650 = vpack.c.b16 %v1542, %v1538
        %v1651 = vpack.c.b16 %v1547, %v1543
        %v1652 = vpack.c.b16 %v1548, %v1544
        %v1653 = vpack.c.b16 %v1549, %v1545
        %v1654 = vpack.c.b16 %v1550, %v1546
        %v1655 = vpack.c.b16 %v1555, %v1551
        %v1656 = vpack.c.b16 %v1556, %v1552
        %v1657 = vpack.c.b16 %v1557, %v1553
        %v1658 = vpack.c.b16 %v1558, %v1554
        %v1659 = vpack.c.b16 %v1563, %v1559
        %v1660 = vpack.c.b16 %v1564, %v1560
        %v1661 = vpack.c.b16 %v1565, %v1561
        %v1662 = vpack.c.b16 %v1566, %v1562
        %v1663 = vpack.c.b16 %v1571, %v1567
        %v1664 = vpack.c.b16 %v1572, %v1568
        %v1665 = vpack.c.b16 %v1573, %v1569
        %v1666 = vpack.c.b16 %v1574, %v1570
        %v1667 = vpack.c.b16 %v1579, %v1575
        %v1668 = vpack.c.b16 %v1580, %v1576
        %v1669 = vpack.c.b16 %v1581, %v1577
        %v1670 = vpack.c.b16 %v1582, %v1578
        %v1671 = vpack.c.b16 %v1587, %v1583
        %v1672 = vpack.c.b16 %v1588, %v1584
        %v1673 = vpack.c.b16 %v1589, %v1585
        %v1674 = vpack.c.b16 %v1590, %v1586
        %v1675 = vpack.c.b16 %v1595, %v1591
        %v1676 = vpack.c.b16 %v1596, %v1592
        %v1677 = vpack.c.b16 %v1597, %v1593
        %v1678 = vpack.c.b16 %v1598, %v1594
        %v1679 = vpack.c.b16 %v1603, %v1599
        %v1680 = vpack.c.b16 %v1604, %v1600
        %v1681 = vpack.c.b16 %v1605, %v1601
        %v1682 = vpack.c.b16 %v1606, %v1602
        %v1683 = vpack.c.b16 %v1611, %v1607
        %v1684 = vpack.c.b16 %v1612, %v1608
        %v1685 = vpack.c.b16 %v1613, %v1609
        %v1686 = vpack.c.b16 %v1614, %v1610
        %v1687 = vpack.c.b16 %v1619, %v1615
        %v1688 = vpack.c.b16 %v1620, %v1616
        %v1689 = vpack.c.b16 %v1621, %v1617
        %v1690 = vpack.c.b16 %v1622, %v1618
        %v1691 = vpack.c.b16 %v1627, %v1623
        %v1692 = vpack.c.b16 %v1628, %v1624
        %v1693 = vpack.c.b16 %v1629, %v1625
        %v1694 = vpack.c.b16 %v1630, %v1626
        %1759 = vmatprep.subr.bf16.mxu0 %v1660
        %1760 = vmatpush1.bf16.msra.mxu0 %v1659
        %1761 = vmatprep.subr.bf16.mxu0 %v1656
        %1762 = vmatpush1.bf16.msra.mxu0 %v1655
        %1763 = vmatprep.subr.bf16.mxu0 %v1652
        %1764 = vmatpush1.bf16.msra.mxu0 %v1651
        %1765 = vmatprep.subr.bf16.mxu0 %v1648
        %1766 = vmatpush1.bf16.msra.mxu0 %v1647
        %1767 = vmatprep.subr.bf16.mxu0 %v1644
        %1768 = vmatpush1.bf16.msra.mxu0 %v1643
        %1769 = vmatprep.subr.bf16.mxu0 %v1640
        %1770 = vmatpush1.bf16.msra.mxu0 %v1639
        %1771 = vmatprep.subr.bf16.mxu0 %v1636
        %1772 = vmatpush1.bf16.msra.mxu0 %v1635
        %1773 = vmatprep.subr.bf16.mxu0 %v1632
        %1774 = vmatpush1.bf16.msra.mxu0 %v1631
        %1775 = vmatprep.subr.bf16.mxu0 %v1692
        %1776 = vmatpush2.bf16.msra.mxu0 %v1691
        %1777 = vmatprep.subr.bf16.mxu0 %v1688
        %1778 = vmatpush2.bf16.msra.mxu0 %v1687
        %1779 = vmatprep.subr.bf16.mxu0 %v1684
        %1780 = vmatpush2.bf16.msra.mxu0 %v1683
        %1781 = vmatprep.subr.bf16.mxu0 %v1680
        %1782 = vmatpush2.bf16.msra.mxu0 %v1679
        %1783 = vmatprep.subr.bf16.mxu0 %v1676
        %1784 = vmatpush2.bf16.msra.mxu0 %v1675
        %1785 = vmatprep.subr.bf16.mxu0 %v1672
        %1786 = vmatpush2.bf16.msra.mxu0 %v1671
        %1787 = vmatprep.subr.bf16.mxu0 %v1668
        %1788 = vmatpush2.bf16.msra.mxu0 %v1667
        %1789 = vmatprep.subr.bf16.mxu0 %v1664
        %1790 = vmatpush2.bf16.msra.mxu0 %v1663
        %1791 = vmatprep.mubr.bf16.mxu0 %v1416
        %1792 = vmatmul.mubr.bf16.gmra.mxu0 %v1415
        %v1793 = vpop.f32.mrf.mxu0
        %v1794 = vadd.f32 %v1422, %v1793
        %v1795 = vpop.f32.mrf.mxu0
        %v1796 = vadd.f32 %v1426, %v1795
        %v1797 = vpop.f32.mrf.mxu0
        %v1798 = vpop.f32.mrf.mxu0
        %1799 = vdwg.mxu0
        %1800 = vmatprep.subr.bf16.mxu0 %v1662
        %1801 = vmatpush1.bf16.msra.mxu0 %v1661
        %1802 = vmatprep.subr.bf16.mxu0 %v1658
        %1803 = vmatpush1.bf16.msra.mxu0 %v1657
        %1804 = vmatprep.subr.bf16.mxu0 %v1654
        %1805 = vmatpush1.bf16.msra.mxu0 %v1653
        %1806 = vmatprep.subr.bf16.mxu0 %v1650
        %1807 = vmatpush1.bf16.msra.mxu0 %v1649
        %1808 = vmatprep.subr.bf16.mxu0 %v1646
        %1809 = vmatpush1.bf16.msra.mxu0 %v1645
        %1810 = vmatprep.subr.bf16.mxu0 %v1642
        %1811 = vmatpush1.bf16.msra.mxu0 %v1641
        %1812 = vmatprep.subr.bf16.mxu0 %v1638
        %1813 = vmatpush1.bf16.msra.mxu0 %v1637
        %1814 = vmatprep.subr.bf16.mxu0 %v1634
        %1815 = vmatpush1.bf16.msra.mxu0 %v1633
        %1816 = vmatprep.subr.bf16.mxu0 %v1694
        %1817 = vmatpush2.bf16.msra.mxu0 %v1693
        %1818 = vmatprep.subr.bf16.mxu0 %v1690
        %1819 = vmatpush2.bf16.msra.mxu0 %v1689
        %1820 = vmatprep.subr.bf16.mxu0 %v1686
        %1821 = vmatpush2.bf16.msra.mxu0 %v1685
        %1822 = vmatprep.subr.bf16.mxu0 %v1682
        %1823 = vmatpush2.bf16.msra.mxu0 %v1681
        %1824 = vmatprep.subr.bf16.mxu0 %v1678
        %1825 = vmatpush2.bf16.msra.mxu0 %v1677
        %1826 = vmatprep.subr.bf16.mxu0 %v1674
        %1827 = vmatpush2.bf16.msra.mxu0 %v1673
        %1828 = vmatprep.subr.bf16.mxu0 %v1670
        %1829 = vmatpush2.bf16.msra.mxu0 %v1669
        %1830 = vmatprep.subr.bf16.mxu0 %v1666
        %1831 = vmatpush2.bf16.msra.mxu0 %v1665
        %1832 = vmatprep.mubr.bf16.mxu0 %v1416
        %1833 = vmatmul.mubr.bf16.gmra.mxu0 %v1415
        %v1834 = vpop.f32.mrf.mxu0
        %v1835 = vadd.f32 %v1430, %v1834
        %v1836 = vpop.f32.mrf.mxu0
        %v1837 = vadd.f32 %v1434, %v1836
        %v1838 = vpop.f32.mrf.mxu0
        %v1839 = vpop.f32.mrf.mxu0
        %1840 = vdwg.mxu0
        %v1841 = vmax.f32 %v1794, 0.0
        %v1842 = vmax.f32 %v1796, 0.0
        %v1843 = vmax.f32 %v1835, 0.0
        %v1844 = vmax.f32 %v1837, 0.0
        %s1845 = scalar_lea.vmem [#allocation3], 768
        %v1846 = vld [vmem:[%s1845] sm:$0xff]
        %v1847 = vld [vmem:[%s1845 + $0x8] sm:$0xff]
        %v1848 = vld [vmem:[%s1845 + $0x10] sm:$0xff]
        %v1849 = vld [vmem:[%s1845 + $0x18] sm:$0xff]
        %v1850 = vld [vmem:[%s1845 + $0x20] sm:$0xff]
        %v1851 = vld [vmem:[%s1845 + $0x28] sm:$0xff]
        %v1852 = vld [vmem:[%s1845 + $0x30] sm:$0xff]
        %v1853 = vld [vmem:[%s1845 + $0x38] sm:$0xff]
        %v1854 = vld [vmem:[%s1845 + $0x40] sm:$0xff]
        %v1855 = vld [vmem:[%s1845 + $0x48] sm:$0xff]
        %v1856 = vld [vmem:[%s1845 + $0x50] sm:$0xff]
        %v1857 = vld [vmem:[%s1845 + $0x58] sm:$0xff]
        %v1858 = vld [vmem:[%s1845 + $0x60] sm:$0xff]
        %v1859 = vld [vmem:[%s1845 + $0x68] sm:$0xff]
        %v1860 = vld [vmem:[%s1845 + $0x70] sm:$0xff]
        %v1861 = vld [vmem:[%s1845 + $0x78] sm:$0xff]
        %v1862 = vld [vmem:[%s1845 + $0x80] sm:$0xff]
        %v1863 = vld [vmem:[%s1845 + $0x88] sm:$0xff]
        %v1864 = vld [vmem:[%s1845 + $0x90] sm:$0xff]
        %v1865 = vld [vmem:[%s1845 + $0x98] sm:$0xff]
        %v1866 = vld [vmem:[%s1845 + $0xa0] sm:$0xff]
        %v1867 = vld [vmem:[%s1845 + $0xa8] sm:$0xff]
        %v1868 = vld [vmem:[%s1845 + $0xb0] sm:$0xff]
        %v1869 = vld [vmem:[%s1845 + $0xb8] sm:$0xff]
        %v1870 = vld [vmem:[%s1845 + $0xc0] sm:$0xff]
        %v1871 = vld [vmem:[%s1845 + $0xc8] sm:$0xff]
        %v1872 = vld [vmem:[%s1845 + $0xd0] sm:$0xff]
        %v1873 = vld [vmem:[%s1845 + $0xd8] sm:$0xff]
        %v1874 = vld [vmem:[%s1845 + $0xe0] sm:$0xff]
        %v1875 = vld [vmem:[%s1845 + $0xe8] sm:$0xff]
        %v1876 = vld [vmem:[%s1845 + $0xf0] sm:$0xff]
        %v1877 = vld [vmem:[%s1845 + $0xf8] sm:$0xff]
        %v1878 = vpack.c.bf16 %v1841, %v1841
        %v1879 = vpack.c.bf16 %v1842, %v1842
        %s1880 = scalar_lea.vmem %s6, 3
        %v1881 = vld [vmem:[%s1880] ss:$8 sm:$0x3]
        %v1883 = vlaneseq
        %v1884 = vshrl.u32 %v1883, 7
        %v1885 = vsub.s32 0, %v1884
        %v1886 = vrot.slane %v1881, %v1885
        %v1887 = vlaneseq
        %v1888 = vshrl.u32 %v1887, 7
        %v1889 = vsub.s32 1, %v1888
        %v1890 = vrot.slane %v1881, %v1889
        %v1925 = vunpack.c.l.b16 %v1846
        %v1926 = vunpack.c.h.b16 %v1846
        %v1927 = vunpack.c.l.b16 %v1847
        %v1928 = vunpack.c.h.b16 %v1847
        %v1929 = vunpack.c.l.b16 %v1848
        %v1930 = vunpack.c.h.b16 %v1848
        %v1931 = vunpack.c.l.b16 %v1849
        %v1932 = vunpack.c.h.b16 %v1849
        %v1933 = vunpack.c.l.b16 %v1850
        %v1934 = vunpack.c.h.b16 %v1850
        %v1935 = vunpack.c.l.b16 %v1851
        %v1936 = vunpack.c.h.b16 %v1851
        %v1937 = vunpack.c.l.b16 %v1852
        %v1938 = vunpack.c.h.b16 %v1852
        %v1939 = vunpack.c.l.b16 %v1853
        %v1940 = vunpack.c.h.b16 %v1853
        %v1941 = vunpack.c.l.b16 %v1854
        %v1942 = vunpack.c.h.b16 %v1854
        %v1943 = vunpack.c.l.b16 %v1855
        %v1944 = vunpack.c.h.b16 %v1855
        %v1945 = vunpack.c.l.b16 %v1856
        %v1946 = vunpack.c.h.b16 %v1856
        %v1947 = vunpack.c.l.b16 %v1857
        %v1948 = vunpack.c.h.b16 %v1857
        %v1949 = vunpack.c.l.b16 %v1858
        %v1950 = vunpack.c.h.b16 %v1858
        %v1951 = vunpack.c.l.b16 %v1859
        %v1952 = vunpack.c.h.b16 %v1859
        %v1953 = vunpack.c.l.b16 %v1860
        %v1954 = vunpack.c.h.b16 %v1860
        %v1955 = vunpack.c.l.b16 %v1861
        %v1956 = vunpack.c.h.b16 %v1861
        %v1957 = vunpack.c.l.b16 %v1862
        %v1958 = vunpack.c.h.b16 %v1862
        %v1959 = vunpack.c.l.b16 %v1863
        %v1960 = vunpack.c.h.b16 %v1863
        %v1961 = vunpack.c.l.b16 %v1864
        %v1962 = vunpack.c.h.b16 %v1864
        %v1963 = vunpack.c.l.b16 %v1865
        %v1964 = vunpack.c.h.b16 %v1865
        %v1965 = vunpack.c.l.b16 %v1866
        %v1966 = vunpack.c.h.b16 %v1866
        %v1967 = vunpack.c.l.b16 %v1867
        %v1968 = vunpack.c.h.b16 %v1867
        %v1969 = vunpack.c.l.b16 %v1868
        %v1970 = vunpack.c.h.b16 %v1868
        %v1971 = vunpack.c.l.b16 %v1869
        %v1972 = vunpack.c.h.b16 %v1869
        %v1973 = vunpack.c.l.b16 %v1870
        %v1974 = vunpack.c.h.b16 %v1870
        %v1975 = vunpack.c.l.b16 %v1871
        %v1976 = vunpack.c.h.b16 %v1871
        %v1977 = vunpack.c.l.b16 %v1872
        %v1978 = vunpack.c.h.b16 %v1872
        %v1979 = vunpack.c.l.b16 %v1873
        %v1980 = vunpack.c.h.b16 %v1873
        %v1981 = vunpack.c.l.b16 %v1874
        %v1982 = vunpack.c.h.b16 %v1874
        %v1983 = vunpack.c.l.b16 %v1875
        %v1984 = vunpack.c.h.b16 %v1875
        %v1985 = vunpack.c.l.b16 %v1876
        %v1986 = vunpack.c.h.b16 %v1876
        %v1987 = vunpack.c.l.b16 %v1877
        %v1988 = vunpack.c.h.b16 %v1877
        %v1989 = vpack.c.b16 %v1927, %v1925
        %v1990 = vpack.c.b16 %v1928, %v1926
        %v1991 = vpack.c.b16 %v1931, %v1929
        %v1992 = vpack.c.b16 %v1932, %v1930
        %v1993 = vpack.c.b16 %v1935, %v1933
        %v1994 = vpack.c.b16 %v1936, %v1934
        %v1995 = vpack.c.b16 %v1939, %v1937
        %v1996 = vpack.c.b16 %v1940, %v1938
        %v1997 = vpack.c.b16 %v1943, %v1941
        %v1998 = vpack.c.b16 %v1944, %v1942
        %v1999 = vpack.c.b16 %v1947, %v1945
        %v2000 = vpack.c.b16 %v1948, %v1946
        %v2001 = vpack.c.b16 %v1951, %v1949
        %v2002 = vpack.c.b16 %v1952, %v1950
        %v2003 = vpack.c.b16 %v1955, %v1953
        %v2004 = vpack.c.b16 %v1956, %v1954
        %v2005 = vpack.c.b16 %v1959, %v1957
        %v2006 = vpack.c.b16 %v1960, %v1958
        %v2007 = vpack.c.b16 %v1963, %v1961
        %v2008 = vpack.c.b16 %v1964, %v1962
        %v2009 = vpack.c.b16 %v1967, %v1965
        %v2010 = vpack.c.b16 %v1968, %v1966
        %v2011 = vpack.c.b16 %v1971, %v1969
        %v2012 = vpack.c.b16 %v1972, %v1970
        %v2013 = vpack.c.b16 %v1975, %v1973
        %v2014 = vpack.c.b16 %v1976, %v1974
        %v2015 = vpack.c.b16 %v1979, %v1977
        %v2016 = vpack.c.b16 %v1980, %v1978
        %v2017 = vpack.c.b16 %v1983, %v1981
        %v2018 = vpack.c.b16 %v1984, %v1982
        %v2019 = vpack.c.b16 %v1987, %v1985
        %v2020 = vpack.c.b16 %v1988, %v1986
        %2053 = vmatprep.subr.bf16.mxu0 %v2004
        %2054 = vmatpush1.bf16.msra.mxu0 %v2003
        %2055 = vmatprep.subr.bf16.mxu0 %v2002
        %2056 = vmatpush1.bf16.msra.mxu0 %v2001
        %2057 = vmatprep.subr.bf16.mxu0 %v2000
        %2058 = vmatpush1.bf16.msra.mxu0 %v1999
        %2059 = vmatprep.subr.bf16.mxu0 %v1998
        %2060 = vmatpush1.bf16.msra.mxu0 %v1997
        %2061 = vmatprep.subr.bf16.mxu0 %v1996
        %2062 = vmatpush1.bf16.msra.mxu0 %v1995
        %2063 = vmatprep.subr.bf16.mxu0 %v1994
        %2064 = vmatpush1.bf16.msra.mxu0 %v1993
        %2065 = vmatprep.subr.bf16.mxu0 %v1992
        %2066 = vmatpush1.bf16.msra.mxu0 %v1991
        %2067 = vmatprep.subr.bf16.mxu0 %v1990
        %2068 = vmatpush1.bf16.msra.mxu0 %v1989
        %2069 = vmatprep.subr.bf16.mxu0 %v2020
        %2070 = vmatpush2.bf16.msra.mxu0 %v2019
        %2071 = vmatprep.subr.bf16.mxu0 %v2018
        %2072 = vmatpush2.bf16.msra.mxu0 %v2017
        %2073 = vmatprep.subr.bf16.mxu0 %v2016
        %2074 = vmatpush2.bf16.msra.mxu0 %v2015
        %2075 = vmatprep.subr.bf16.mxu0 %v2014
        %2076 = vmatpush2.bf16.msra.mxu0 %v2013
        %2077 = vmatprep.subr.bf16.mxu0 %v2012
        %2078 = vmatpush2.bf16.msra.mxu0 %v2011
        %2079 = vmatprep.subr.bf16.mxu0 %v2010
        %2080 = vmatpush2.bf16.msra.mxu0 %v2009
        %2081 = vmatprep.subr.bf16.mxu0 %v2008
        %2082 = vmatpush2.bf16.msra.mxu0 %v2007
        %2083 = vmatprep.subr.bf16.mxu0 %v2006
        %2084 = vmatpush2.bf16.msra.mxu0 %v2005
        %2085 = vmatprep.mubr.bf16.mxu0 %v1879
        %2086 = vmatmul.mubr.bf16.gmra.mxu0 %v1878
        %v2087 = vpop.f32.mrf.mxu0
        %v2088 = vadd.f32 %v1886, %v2087
        %v2089 = vpop.f32.mrf.mxu0
        %v2090 = vadd.f32 %v1890, %v2089
        %v2091 = vpop.f32.mrf.mxu0
        %v2092 = vpop.f32.mrf.mxu0
        %2093 = vdwg.mxu0
        %v2094 = vmax.f32 %v2088, 0.0
        %v2095 = vmax.f32 %v2090, 0.0
        %v2096 = vld [vmem:[#allocation8] sm:$0xf]
        %v2097 = vld [vmem:[#allocation8 + $0x4] sm:$0xf]
        %v2098 = vld [vmem:[#allocation8 + $0x8] sm:$0xf]
        %v2099 = vld [vmem:[#allocation8 + $0xc] sm:$0xf]
        %v2100 = vld [vmem:[#allocation8 + $0x10] sm:$0xf]
        %v2101 = vld [vmem:[#allocation8 + $0x14] sm:$0xf]
        %v2102 = vld [vmem:[#allocation8 + $0x18] sm:$0xf]
        %v2103 = vld [vmem:[#allocation8 + $0x1c] sm:$0xf]
        %v2104 = vld [vmem:[#allocation8 + $0x20] sm:$0xf]
        %v2105 = vld [vmem:[#allocation8 + $0x24] sm:$0xf]
        %v2106 = vld [vmem:[#allocation8 + $0x28] sm:$0xf]
        %v2107 = vld [vmem:[#allocation8 + $0x2c] sm:$0xf]
        %v2108 = vld [vmem:[#allocation8 + $0x30] sm:$0xf]
        %v2109 = vld [vmem:[#allocation8 + $0x34] sm:$0xf]
        %v2110 = vld [vmem:[#allocation8 + $0x38] sm:$0xf]
        %v2111 = vld [vmem:[#allocation8 + $0x3c] sm:$0xf]
        %v2112 = vld [vmem:[#allocation8 + $0x40] sm:$0xf]
        %v2113 = vld [vmem:[#allocation8 + $0x44] sm:$0xf]
        %v2114 = vld [vmem:[#allocation8 + $0x48] sm:$0xf]
        %v2115 = vld [vmem:[#allocation8 + $0x4c] sm:$0xf]
        %v2116 = vld [vmem:[#allocation8 + $0x50] sm:$0xf]
        %v2117 = vld [vmem:[#allocation8 + $0x54] sm:$0xf]
        %v2118 = vld [vmem:[#allocation8 + $0x58] sm:$0xf]
        %v2119 = vld [vmem:[#allocation8 + $0x5c] sm:$0xf]
        %v2120 = vld [vmem:[#allocation8 + $0x60] sm:$0xf]
        %v2121 = vld [vmem:[#allocation8 + $0x64] sm:$0xf]
        %v2122 = vld [vmem:[#allocation8 + $0x68] sm:$0xf]
        %v2123 = vld [vmem:[#allocation8 + $0x6c] sm:$0xf]
        %v2124 = vld [vmem:[#allocation8 + $0x70] sm:$0xf]
        %v2125 = vld [vmem:[#allocation8 + $0x74] sm:$0xf]
        %v2126 = vld [vmem:[#allocation8 + $0x78] sm:$0xf]
        %v2127 = vld [vmem:[#allocation8 + $0x7c] sm:$0xf]
        %v2128 = vpack.c.bf16 %v2094, %v2094
        %v2129 = vpack.c.bf16 %v2095, %v2095
        %v2130 = vld [vmem:[%s6 + $0x6] ss:$0 sm:$0xff]
        %v2163 = vunpack.c.l.b16 %v2096
        %v2164 = vunpack.c.l.b16 %v2097
        %v2165 = vunpack.c.l.b16 %v2098
        %v2166 = vunpack.c.l.b16 %v2099
        %v2167 = vunpack.c.l.b16 %v2100
        %v2168 = vunpack.c.l.b16 %v2101
        %v2169 = vunpack.c.l.b16 %v2102
        %v2170 = vunpack.c.l.b16 %v2103
        %v2171 = vunpack.c.l.b16 %v2104
        %v2172 = vunpack.c.l.b16 %v2105
        %v2173 = vunpack.c.l.b16 %v2106
        %v2174 = vunpack.c.l.b16 %v2107
        %v2175 = vunpack.c.l.b16 %v2108
        %v2176 = vunpack.c.l.b16 %v2109
        %v2177 = vunpack.c.l.b16 %v2110
        %v2178 = vunpack.c.l.b16 %v2111
        %v2179 = vunpack.c.l.b16 %v2112
        %v2180 = vunpack.c.l.b16 %v2113
        %v2181 = vunpack.c.l.b16 %v2114
        %v2182 = vunpack.c.l.b16 %v2115
        %v2183 = vunpack.c.l.b16 %v2116
        %v2184 = vunpack.c.l.b16 %v2117
        %v2185 = vunpack.c.l.b16 %v2118
        %v2186 = vunpack.c.l.b16 %v2119
        %v2187 = vunpack.c.l.b16 %v2120
        %v2188 = vunpack.c.l.b16 %v2121
        %v2189 = vunpack.c.l.b16 %v2122
        %v2190 = vunpack.c.l.b16 %v2123
        %v2191 = vunpack.c.l.b16 %v2124
        %v2192 = vunpack.c.l.b16 %v2125
        %v2193 = vunpack.c.l.b16 %v2126
        %v2194 = vunpack.c.l.b16 %v2127
        %v2195 = vpack.c.b16 %v2164, %v2163
        %v2196 = vpack.c.b16 %v2166, %v2165
        %v2197 = vpack.c.b16 %v2168, %v2167
        %v2198 = vpack.c.b16 %v2170, %v2169
        %v2199 = vpack.c.b16 %v2172, %v2171
        %v2200 = vpack.c.b16 %v2174, %v2173
        %v2201 = vpack.c.b16 %v2176, %v2175
        %v2202 = vpack.c.b16 %v2178, %v2177
        %v2203 = vpack.c.b16 %v2180, %v2179
        %v2204 = vpack.c.b16 %v2182, %v2181
        %v2205 = vpack.c.b16 %v2184, %v2183
        %v2206 = vpack.c.b16 %v2186, %v2185
        %v2207 = vpack.c.b16 %v2188, %v2187
        %v2208 = vpack.c.b16 %v2190, %v2189
        %v2209 = vpack.c.b16 %v2192, %v2191
        %v2210 = vpack.c.b16 %v2194, %v2193
        %2227 = vmatprep.subr.bf16.mxu0 0
        %2228 = vmatpush1.bf16.msra.mxu0 %v2202
        %2229 = vmatprep.subr.bf16.mxu0 0
        %2230 = vmatpush1.bf16.msra.mxu0 %v2201
        %2231 = vmatprep.subr.bf16.mxu0 0
        %2232 = vmatpush1.bf16.msra.mxu0 %v2200
        %2233 = vmatprep.subr.bf16.mxu0 0
        %2234 = vmatpush1.bf16.msra.mxu0 %v2199
        %2235 = vmatprep.subr.bf16.mxu0 0
        %2236 = vmatpush1.bf16.msra.mxu0 %v2198
        %2237 = vmatprep.subr.bf16.mxu0 0
        %2238 = vmatpush1.bf16.msra.mxu0 %v2197
        %2239 = vmatprep.subr.bf16.mxu0 0
        %2240 = vmatpush1.bf16.msra.mxu0 %v2196
        %2241 = vmatprep.subr.bf16.mxu0 0
        %2242 = vmatpush1.bf16.msra.mxu0 %v2195
        %2243 = vmatprep.subr.bf16.mxu0 0
        %2244 = vmatpush2.bf16.msra.mxu0 %v2210
        %2245 = vmatprep.subr.bf16.mxu0 0
        %2246 = vmatpush2.bf16.msra.mxu0 %v2209
        %2247 = vmatprep.subr.bf16.mxu0 0
        %2248 = vmatpush2.bf16.msra.mxu0 %v2208
        %2249 = vmatprep.subr.bf16.mxu0 0
        %2250 = vmatpush2.bf16.msra.mxu0 %v2207
        %2251 = vmatprep.subr.bf16.mxu0 0
        %2252 = vmatpush2.bf16.msra.mxu0 %v2206
        %2253 = vmatprep.subr.bf16.mxu0 0
        %2254 = vmatpush2.bf16.msra.mxu0 %v2205
        %2255 = vmatprep.subr.bf16.mxu0 0
        %2256 = vmatpush2.bf16.msra.mxu0 %v2204
        %2257 = vmatprep.subr.bf16.mxu0 0
        %2258 = vmatpush2.bf16.msra.mxu0 %v2203
        %2259 = vmatprep.mubr.bf16.mxu0 %v2129
        %2260 = vmatmul.mubr.bf16.gmra.mxu0 %v2128
        %v2261 = vpop.f32.mrf.mxu0
        %v2262 = vadd.f32 %v2130, %v2261
        %v2263 = vpop.f32.mrf.mxu0
        %v2264 = vpop.f32.mrf.mxu0
        %v2265 = vpop.f32.mrf.mxu0
        %2266 = vdwg.mxu0
        %2267 = vst [vmem:[%s419] sm:$0xff] %v2262
        %s2268 = scalar_lea.vmem [#allocation3], 1024
        %v2269 = vld [vmem:[%s2268] sm:$0xff]
        %v2270 = vld [vmem:[%s2268 + $0x8] sm:$0xff]
        %v2271 = vld [vmem:[%s2268 + $0x10] sm:$0xff]
        %v2272 = vld [vmem:[%s2268 + $0x18] sm:$0xff]
        %v2273 = vld [vmem:[%s2268 + $0x20] sm:$0xff]
        %v2274 = vld [vmem:[%s2268 + $0x28] sm:$0xff]
        %v2275 = vld [vmem:[%s2268 + $0x30] sm:$0xff]
        %v2276 = vld [vmem:[%s2268 + $0x38] sm:$0xff]
        %v2277 = vld [vmem:[%s2268 + $0x40] sm:$0xff]
        %v2278 = vld [vmem:[%s2268 + $0x48] sm:$0xff]
        %v2279 = vld [vmem:[%s2268 + $0x50] sm:$0xff]
        %v2280 = vld [vmem:[%s2268 + $0x58] sm:$0xff]
        %v2281 = vld [vmem:[%s2268 + $0x60] sm:$0xff]
        %v2282 = vld [vmem:[%s2268 + $0x68] sm:$0xff]
        %v2283 = vld [vmem:[%s2268 + $0x70] sm:$0xff]
        %v2284 = vld [vmem:[%s2268 + $0x78] sm:$0xff]
        %v2285 = vld [vmem:[%s2268 + $0x80] sm:$0xff]
        %v2286 = vld [vmem:[%s2268 + $0x88] sm:$0xff]
        %v2287 = vld [vmem:[%s2268 + $0x90] sm:$0xff]
        %v2288 = vld [vmem:[%s2268 + $0x98] sm:$0xff]
        %v2289 = vld [vmem:[%s2268 + $0xa0] sm:$0xff]
        %v2290 = vld [vmem:[%s2268 + $0xa8] sm:$0xff]
        %v2291 = vld [vmem:[%s2268 + $0xb0] sm:$0xff]
        %v2292 = vld [vmem:[%s2268 + $0xb8] sm:$0xff]
        %v2293 = vld [vmem:[%s2268 + $0xc0] sm:$0xff]
        %v2294 = vld [vmem:[%s2268 + $0xc8] sm:$0xff]
        %v2295 = vld [vmem:[%s2268 + $0xd0] sm:$0xff]
        %v2296 = vld [vmem:[%s2268 + $0xd8] sm:$0xff]
        %v2297 = vld [vmem:[%s2268 + $0xe0] sm:$0xff]
        %v2298 = vld [vmem:[%s2268 + $0xe8] sm:$0xff]
        %v2299 = vld [vmem:[%s2268 + $0xf0] sm:$0xff]
        %v2300 = vld [vmem:[%s2268 + $0xf8] sm:$0xff]
        %v2301 = vpack.c.bf16 %v1843, %v1843
        %v2302 = vpack.c.bf16 %v1844, %v1844
        %s2303 = scalar_lea.vmem %s6, 4
        %v2304 = vld [vmem:[%s2303] ss:$8 sm:$0x3]
        %v2306 = vlaneseq
        %v2307 = vshrl.u32 %v2306, 7
        %v2308 = vsub.s32 0, %v2307
        %v2309 = vrot.slane %v2304, %v2308
        %v2310 = vlaneseq
        %v2311 = vshrl.u32 %v2310, 7
        %v2312 = vsub.s32 1, %v2311
        %v2313 = vrot.slane %v2304, %v2312
        %v2348 = vunpack.c.l.b16 %v2269
        %v2349 = vunpack.c.h.b16 %v2269
        %v2350 = vunpack.c.l.b16 %v2270
        %v2351 = vunpack.c.h.b16 %v2270
        %v2352 = vunpack.c.l.b16 %v2271
        %v2353 = vunpack.c.h.b16 %v2271
        %v2354 = vunpack.c.l.b16 %v2272
        %v2355 = vunpack.c.h.b16 %v2272
        %v2356 = vunpack.c.l.b16 %v2273
        %v2357 = vunpack.c.h.b16 %v2273
        %v2358 = vunpack.c.l.b16 %v2274
        %v2359 = vunpack.c.h.b16 %v2274
        %v2360 = vunpack.c.l.b16 %v2275
        %v2361 = vunpack.c.h.b16 %v2275
        %v2362 = vunpack.c.l.b16 %v2276
        %v2363 = vunpack.c.h.b16 %v2276
        %v2364 = vunpack.c.l.b16 %v2277
        %v2365 = vunpack.c.h.b16 %v2277
        %v2366 = vunpack.c.l.b16 %v2278
        %v2367 = vunpack.c.h.b16 %v2278
        %v2368 = vunpack.c.l.b16 %v2279
        %v2369 = vunpack.c.h.b16 %v2279
        %v2370 = vunpack.c.l.b16 %v2280
        %v2371 = vunpack.c.h.b16 %v2280
        %v2372 = vunpack.c.l.b16 %v2281
        %v2373 = vunpack.c.h.b16 %v2281
        %v2374 = vunpack.c.l.b16 %v2282
        %v2375 = vunpack.c.h.b16 %v2282
        %v2376 = vunpack.c.l.b16 %v2283
        %v2377 = vunpack.c.h.b16 %v2283
        %v2378 = vunpack.c.l.b16 %v2284
        %v2379 = vunpack.c.h.b16 %v2284
        %v2380 = vunpack.c.l.b16 %v2285
        %v2381 = vunpack.c.h.b16 %v2285
        %v2382 = vunpack.c.l.b16 %v2286
        %v2383 = vunpack.c.h.b16 %v2286
        %v2384 = vunpack.c.l.b16 %v2287
        %v2385 = vunpack.c.h.b16 %v2287
        %v2386 = vunpack.c.l.b16 %v2288
        %v2387 = vunpack.c.h.b16 %v2288
        %v2388 = vunpack.c.l.b16 %v2289
        %v2389 = vunpack.c.h.b16 %v2289
        %v2390 = vunpack.c.l.b16 %v2290
        %v2391 = vunpack.c.h.b16 %v2290
        %v2392 = vunpack.c.l.b16 %v2291
        %v2393 = vunpack.c.h.b16 %v2291
        %v2394 = vunpack.c.l.b16 %v2292
        %v2395 = vunpack.c.h.b16 %v2292
        %v2396 = vunpack.c.l.b16 %v2293
        %v2397 = vunpack.c.h.b16 %v2293
        %v2398 = vunpack.c.l.b16 %v2294
        %v2399 = vunpack.c.h.b16 %v2294
        %v2400 = vunpack.c.l.b16 %v2295
        %v2401 = vunpack.c.h.b16 %v2295
        %v2402 = vunpack.c.l.b16 %v2296
        %v2403 = vunpack.c.h.b16 %v2296
        %v2404 = vunpack.c.l.b16 %v2297
        %v2405 = vunpack.c.h.b16 %v2297
        %v2406 = vunpack.c.l.b16 %v2298
        %v2407 = vunpack.c.h.b16 %v2298
        %v2408 = vunpack.c.l.b16 %v2299
        %v2409 = vunpack.c.h.b16 %v2299
        %v2410 = vunpack.c.l.b16 %v2300
        %v2411 = vunpack.c.h.b16 %v2300
        %v2412 = vpack.c.b16 %v2350, %v2348
        %v2413 = vpack.c.b16 %v2351, %v2349
        %v2414 = vpack.c.b16 %v2354, %v2352
        %v2415 = vpack.c.b16 %v2355, %v2353
        %v2416 = vpack.c.b16 %v2358, %v2356
        %v2417 = vpack.c.b16 %v2359, %v2357
        %v2418 = vpack.c.b16 %v2362, %v2360
        %v2419 = vpack.c.b16 %v2363, %v2361
        %v2420 = vpack.c.b16 %v2366, %v2364
        %v2421 = vpack.c.b16 %v2367, %v2365
        %v2422 = vpack.c.b16 %v2370, %v2368
        %v2423 = vpack.c.b16 %v2371, %v2369
        %v2424 = vpack.c.b16 %v2374, %v2372
        %v2425 = vpack.c.b16 %v2375, %v2373
        %v2426 = vpack.c.b16 %v2378, %v2376
        %v2427 = vpack.c.b16 %v2379, %v2377
        %v2428 = vpack.c.b16 %v2382, %v2380
        %v2429 = vpack.c.b16 %v2383, %v2381
        %v2430 = vpack.c.b16 %v2386, %v2384
        %v2431 = vpack.c.b16 %v2387, %v2385
        %v2432 = vpack.c.b16 %v2390, %v2388
        %v2433 = vpack.c.b16 %v2391, %v2389
        %v2434 = vpack.c.b16 %v2394, %v2392
        %v2435 = vpack.c.b16 %v2395, %v2393
        %v2436 = vpack.c.b16 %v2398, %v2396
        %v2437 = vpack.c.b16 %v2399, %v2397
        %v2438 = vpack.c.b16 %v2402, %v2400
        %v2439 = vpack.c.b16 %v2403, %v2401
        %v2440 = vpack.c.b16 %v2406, %v2404
        %v2441 = vpack.c.b16 %v2407, %v2405
        %v2442 = vpack.c.b16 %v2410, %v2408
        %v2443 = vpack.c.b16 %v2411, %v2409
        %2476 = vmatprep.subr.bf16.mxu0 %v2427
        %2477 = vmatpush1.bf16.msra.mxu0 %v2426
        %2478 = vmatprep.subr.bf16.mxu0 %v2425
        %2479 = vmatpush1.bf16.msra.mxu0 %v2424
        %2480 = vmatprep.subr.bf16.mxu0 %v2423
        %2481 = vmatpush1.bf16.msra.mxu0 %v2422
        %2482 = vmatprep.subr.bf16.mxu0 %v2421
        %2483 = vmatpush1.bf16.msra.mxu0 %v2420
        %2484 = vmatprep.subr.bf16.mxu0 %v2419
        %2485 = vmatpush1.bf16.msra.mxu0 %v2418
        %2486 = vmatprep.subr.bf16.mxu0 %v2417
        %2487 = vmatpush1.bf16.msra.mxu0 %v2416
        %2488 = vmatprep.subr.bf16.mxu0 %v2415
        %2489 = vmatpush1.bf16.msra.mxu0 %v2414
        %2490 = vmatprep.subr.bf16.mxu0 %v2413
        %2491 = vmatpush1.bf16.msra.mxu0 %v2412
        %2492 = vmatprep.subr.bf16.mxu0 %v2443
        %2493 = vmatpush2.bf16.msra.mxu0 %v2442
        %2494 = vmatprep.subr.bf16.mxu0 %v2441
        %2495 = vmatpush2.bf16.msra.mxu0 %v2440
        %2496 = vmatprep.subr.bf16.mxu0 %v2439
        %2497 = vmatpush2.bf16.msra.mxu0 %v2438
        %2498 = vmatprep.subr.bf16.mxu0 %v2437
        %2499 = vmatpush2.bf16.msra.mxu0 %v2436
        %2500 = vmatprep.subr.bf16.mxu0 %v2435
        %2501 = vmatpush2.bf16.msra.mxu0 %v2434
        %2502 = vmatprep.subr.bf16.mxu0 %v2433
        %2503 = vmatpush2.bf16.msra.mxu0 %v2432
        %2504 = vmatprep.subr.bf16.mxu0 %v2431
        %2505 = vmatpush2.bf16.msra.mxu0 %v2430
        %2506 = vmatprep.subr.bf16.mxu0 %v2429
        %2507 = vmatpush2.bf16.msra.mxu0 %v2428
        %2508 = vmatprep.mubr.bf16.mxu0 %v2302
        %2509 = vmatmul.mubr.bf16.gmra.mxu0 %v2301
        %v2510 = vpop.f32.mrf.mxu0
        %v2511 = vadd.f32 %v2309, %v2510
        %v2512 = vpop.f32.mrf.mxu0
        %v2513 = vadd.f32 %v2313, %v2512
        %v2514 = vpop.f32.mrf.mxu0
        %v2515 = vpop.f32.mrf.mxu0
        %2516 = vdwg.mxu0
        %v2517 = vmax.f32 %v2511, 0.0
        %v2518 = vmax.f32 %v2513, 0.0
        %s2519 = scalar_lea.vmem [#allocation3], 1280
        %v2520 = vld [vmem:[%s2519] sm:$0xff]
        %v2521 = vld [vmem:[%s2519 + $0x8] sm:$0xff]
        %v2522 = vld [vmem:[%s2519 + $0x10] sm:$0xff]
        %v2523 = vld [vmem:[%s2519 + $0x18] sm:$0xff]
        %v2524 = vld [vmem:[%s2519 + $0x20] sm:$0xff]
        %v2525 = vld [vmem:[%s2519 + $0x28] sm:$0xff]
        %v2526 = vld [vmem:[%s2519 + $0x30] sm:$0xff]
        %v2527 = vld [vmem:[%s2519 + $0x38] sm:$0xff]
        %v2528 = vld [vmem:[%s2519 + $0x40] sm:$0xff]
        %v2529 = vld [vmem:[%s2519 + $0x48] sm:$0xff]
        %v2530 = vld [vmem:[%s2519 + $0x50] sm:$0xff]
        %v2531 = vld [vmem:[%s2519 + $0x58] sm:$0xff]
        %v2532 = vld [vmem:[%s2519 + $0x60] sm:$0xff]
        %v2533 = vld [vmem:[%s2519 + $0x68] sm:$0xff]
        %v2534 = vld [vmem:[%s2519 + $0x70] sm:$0xff]
        %v2535 = vld [vmem:[%s2519 + $0x78] sm:$0xff]
        %v2536 = vld [vmem:[%s2519 + $0x80] sm:$0xff]
        %v2537 = vld [vmem:[%s2519 + $0x88] sm:$0xff]
        %v2538 = vld [vmem:[%s2519 + $0x90] sm:$0xff]
        %v2539 = vld [vmem:[%s2519 + $0x98] sm:$0xff]
        %v2540 = vld [vmem:[%s2519 + $0xa0] sm:$0xff]
        %v2541 = vld [vmem:[%s2519 + $0xa8] sm:$0xff]
        %v2542 = vld [vmem:[%s2519 + $0xb0] sm:$0xff]
        %v2543 = vld [vmem:[%s2519 + $0xb8] sm:$0xff]
        %v2544 = vld [vmem:[%s2519 + $0xc0] sm:$0xff]
        %v2545 = vld [vmem:[%s2519 + $0xc8] sm:$0xff]
        %v2546 = vld [vmem:[%s2519 + $0xd0] sm:$0xff]
        %v2547 = vld [vmem:[%s2519 + $0xd8] sm:$0xff]
        %v2548 = vld [vmem:[%s2519 + $0xe0] sm:$0xff]
        %v2549 = vld [vmem:[%s2519 + $0xe8] sm:$0xff]
        %v2550 = vld [vmem:[%s2519 + $0xf0] sm:$0xff]
        %v2551 = vld [vmem:[%s2519 + $0xf8] sm:$0xff]
        %v2552 = vpack.c.bf16 %v2517, %v2517
        %v2553 = vpack.c.bf16 %v2518, %v2518
        %s2554 = scalar_lea.vmem %s6, 5
        %v2555 = vld [vmem:[%s2554] ss:$8 sm:$0x3]
        %v2557 = vlaneseq
        %v2558 = vshrl.u32 %v2557, 7
        %v2559 = vsub.s32 0, %v2558
        %v2560 = vrot.slane %v2555, %v2559
        %v2561 = vlaneseq
        %v2562 = vshrl.u32 %v2561, 7
        %v2563 = vsub.s32 1, %v2562
        %v2564 = vrot.slane %v2555, %v2563
        %v2599 = vunpack.c.l.b16 %v2520
        %v2600 = vunpack.c.h.b16 %v2520
        %v2601 = vunpack.c.l.b16 %v2521
        %v2602 = vunpack.c.h.b16 %v2521
        %v2603 = vunpack.c.l.b16 %v2522
        %v2604 = vunpack.c.h.b16 %v2522
        %v2605 = vunpack.c.l.b16 %v2523
        %v2606 = vunpack.c.h.b16 %v2523
        %v2607 = vunpack.c.l.b16 %v2524
        %v2608 = vunpack.c.h.b16 %v2524
        %v2609 = vunpack.c.l.b16 %v2525
        %v2610 = vunpack.c.h.b16 %v2525
        %v2611 = vunpack.c.l.b16 %v2526
        %v2612 = vunpack.c.h.b16 %v2526
        %v2613 = vunpack.c.l.b16 %v2527
        %v2614 = vunpack.c.h.b16 %v2527
        %v2615 = vunpack.c.l.b16 %v2528
        %v2616 = vunpack.c.h.b16 %v2528
        %v2617 = vunpack.c.l.b16 %v2529
        %v2618 = vunpack.c.h.b16 %v2529
        %v2619 = vunpack.c.l.b16 %v2530
        %v2620 = vunpack.c.h.b16 %v2530
        %v2621 = vunpack.c.l.b16 %v2531
        %v2622 = vunpack.c.h.b16 %v2531
        %v2623 = vunpack.c.l.b16 %v2532
        %v2624 = vunpack.c.h.b16 %v2532
        %v2625 = vunpack.c.l.b16 %v2533
        %v2626 = vunpack.c.h.b16 %v2533
        %v2627 = vunpack.c.l.b16 %v2534
        %v2628 = vunpack.c.h.b16 %v2534
        %v2629 = vunpack.c.l.b16 %v2535
        %v2630 = vunpack.c.h.b16 %v2535
        %v2631 = vunpack.c.l.b16 %v2536
        %v2632 = vunpack.c.h.b16 %v2536
        %v2633 = vunpack.c.l.b16 %v2537
        %v2634 = vunpack.c.h.b16 %v2537
        %v2635 = vunpack.c.l.b16 %v2538
        %v2636 = vunpack.c.h.b16 %v2538
        %v2637 = vunpack.c.l.b16 %v2539
        %v2638 = vunpack.c.h.b16 %v2539
        %v2639 = vunpack.c.l.b16 %v2540
        %v2640 = vunpack.c.h.b16 %v2540
        %v2641 = vunpack.c.l.b16 %v2541
        %v2642 = vunpack.c.h.b16 %v2541
        %v2643 = vunpack.c.l.b16 %v2542
        %v2644 = vunpack.c.h.b16 %v2542
        %v2645 = vunpack.c.l.b16 %v2543
        %v2646 = vunpack.c.h.b16 %v2543
        %v2647 = vunpack.c.l.b16 %v2544
        %v2648 = vunpack.c.h.b16 %v2544
        %v2649 = vunpack.c.l.b16 %v2545
        %v2650 = vunpack.c.h.b16 %v2545
        %v2651 = vunpack.c.l.b16 %v2546
        %v2652 = vunpack.c.h.b16 %v2546
        %v2653 = vunpack.c.l.b16 %v2547
        %v2654 = vunpack.c.h.b16 %v2547
        %v2655 = vunpack.c.l.b16 %v2548
        %v2656 = vunpack.c.h.b16 %v2548
        %v2657 = vunpack.c.l.b16 %v2549
        %v2658 = vunpack.c.h.b16 %v2549
        %v2659 = vunpack.c.l.b16 %v2550
        %v2660 = vunpack.c.h.b16 %v2550
        %v2661 = vunpack.c.l.b16 %v2551
        %v2662 = vunpack.c.h.b16 %v2551
        %v2663 = vpack.c.b16 %v2601, %v2599
        %v2664 = vpack.c.b16 %v2602, %v2600
        %v2665 = vpack.c.b16 %v2605, %v2603
        %v2666 = vpack.c.b16 %v2606, %v2604
        %v2667 = vpack.c.b16 %v2609, %v2607
        %v2668 = vpack.c.b16 %v2610, %v2608
        %v2669 = vpack.c.b16 %v2613, %v2611
        %v2670 = vpack.c.b16 %v2614, %v2612
        %v2671 = vpack.c.b16 %v2617, %v2615
        %v2672 = vpack.c.b16 %v2618, %v2616
        %v2673 = vpack.c.b16 %v2621, %v2619
        %v2674 = vpack.c.b16 %v2622, %v2620
        %v2675 = vpack.c.b16 %v2625, %v2623
        %v2676 = vpack.c.b16 %v2626, %v2624
        %v2677 = vpack.c.b16 %v2629, %v2627
        %v2678 = vpack.c.b16 %v2630, %v2628
        %v2679 = vpack.c.b16 %v2633, %v2631
        %v2680 = vpack.c.b16 %v2634, %v2632
        %v2681 = vpack.c.b16 %v2637, %v2635
        %v2682 = vpack.c.b16 %v2638, %v2636
        %v2683 = vpack.c.b16 %v2641, %v2639
        %v2684 = vpack.c.b16 %v2642, %v2640
        %v2685 = vpack.c.b16 %v2645, %v2643
        %v2686 = vpack.c.b16 %v2646, %v2644
        %v2687 = vpack.c.b16 %v2649, %v2647
        %v2688 = vpack.c.b16 %v2650, %v2648
        %v2689 = vpack.c.b16 %v2653, %v2651
        %v2690 = vpack.c.b16 %v2654, %v2652
        %v2691 = vpack.c.b16 %v2657, %v2655
        %v2692 = vpack.c.b16 %v2658, %v2656
        %v2693 = vpack.c.b16 %v2661, %v2659
        %v2694 = vpack.c.b16 %v2662, %v2660
        %2727 = vmatprep.subr.bf16.mxu0 %v2678
        %2728 = vmatpush1.bf16.msra.mxu0 %v2677
        %2729 = vmatprep.subr.bf16.mxu0 %v2676
        %2730 = vmatpush1.bf16.msra.mxu0 %v2675
        %2731 = vmatprep.subr.bf16.mxu0 %v2674
        %2732 = vmatpush1.bf16.msra.mxu0 %v2673
        %2733 = vmatprep.subr.bf16.mxu0 %v2672
        %2734 = vmatpush1.bf16.msra.mxu0 %v2671
        %2735 = vmatprep.subr.bf16.mxu0 %v2670
        %2736 = vmatpush1.bf16.msra.mxu0 %v2669
        %2737 = vmatprep.subr.bf16.mxu0 %v2668
        %2738 = vmatpush1.bf16.msra.mxu0 %v2667
        %2739 = vmatprep.subr.bf16.mxu0 %v2666
        %2740 = vmatpush1.bf16.msra.mxu0 %v2665
        %2741 = vmatprep.subr.bf16.mxu0 %v2664
        %2742 = vmatpush1.bf16.msra.mxu0 %v2663
        %2743 = vmatprep.subr.bf16.mxu0 %v2694
        %2744 = vmatpush2.bf16.msra.mxu0 %v2693
        %2745 = vmatprep.subr.bf16.mxu0 %v2692
        %2746 = vmatpush2.bf16.msra.mxu0 %v2691
        %2747 = vmatprep.subr.bf16.mxu0 %v2690
        %2748 = vmatpush2.bf16.msra.mxu0 %v2689
        %2749 = vmatprep.subr.bf16.mxu0 %v2688
        %2750 = vmatpush2.bf16.msra.mxu0 %v2687
        %2751 = vmatprep.subr.bf16.mxu0 %v2686
        %2752 = vmatpush2.bf16.msra.mxu0 %v2685
        %2753 = vmatprep.subr.bf16.mxu0 %v2684
        %2754 = vmatpush2.bf16.msra.mxu0 %v2683
        %2755 = vmatprep.subr.bf16.mxu0 %v2682
        %2756 = vmatpush2.bf16.msra.mxu0 %v2681
        %2757 = vmatprep.subr.bf16.mxu0 %v2680
        %2758 = vmatpush2.bf16.msra.mxu0 %v2679
        %2759 = vmatprep.mubr.bf16.mxu0 %v2553
        %2760 = vmatmul.mubr.bf16.gmra.mxu0 %v2552
        %v2761 = vpop.f32.mrf.mxu0
        %v2762 = vadd.f32 %v2560, %v2761
        %v2763 = vpop.f32.mrf.mxu0
        %v2764 = vadd.f32 %v2564, %v2763
        %v2765 = vpop.f32.mrf.mxu0
        %v2766 = vpop.f32.mrf.mxu0
        %2767 = vdwg.mxu0
        %2768 = vst [vmem:[%s411] sm:$0xff] %v2762
        %2769 = vst [vmem:[%s411 + $0x8] sm:$0xff] %v2764
        %2770 = vst [vmem:[#allocation2] sm:$0xff] %v2762
        %2771 = vst [vmem:[#allocation2 + $0x8] sm:$0xff] %v2764
        %p2772 = scmp.lt.s32.totalorder %s30, 3
        %s2773 = scalar_select %p2772, %s30, 3
        %s2774 = smul.addr %s2773, 8
        %s2775 = scalar_lea.vmem %s8, %s2774
        %s2776 = sand.u32 %s237, 1
        %s2777 = scalar_lea.sflag [#allocation5], %s2776
        %s2778 = sand.u32 %s237, 1
        %s2779 = smul.addr %s2778, 16
        %s2780 = scalar_lea.vmem [#allocation9], %s2779
        %s2781 = sand.u32 %s263, 1
        %s2782 = scalar_lea.sflag [#allocation11], %s2781
        %s2783 = sand.u32 %s263, 1
        %s2784 = smul.addr %s2783, 16
        %s2785 = scalar_lea.vmem [#allocation10], %s2784
        // Predicated region
        $region69: #{autoencoder_forward_seq.1} parent=51 // pred_check
          %p2786 = pneg %p221
        $region70: #{autoencoder_forward_seq.1} parent=51 // pred_check_branch
          %2788 = sbr.rel (%p2786) target = $region72
        $region71: #{autoencoder_forward_seq.1} parent=51 // pred_region
          _
        $region72: #{autoencoder_forward_seq.1} parent=51 // pred_fallthru
          _
        // Predicated region
        $region73: #{autoencoder_forward_seq.1} parent=51 // pred_check
          %p2789 = pneg %p247
        $region74: #{autoencoder_forward_seq.1} parent=51 // pred_check_branch
          %2791 = sbr.rel (%p2789) target = $region76
        $region75: #{autoencoder_forward_seq.1} parent=51 // pred_region
          %s2793 = ssub.s32 256, 256
          %2794 = vsyncadd %s2777, %s2793
          %s2795 = smul.addr %s30, 2
          %s2796 = smul.addr %s2795, 128
          %s2797 = scalar_lea.hbm %s9, %s2796
          %s2799 = sshll.u32 %s2780, 4
          %s2800 = int_to_ptr.vmem [resolvable:$true] %s2799
          %2802 = dma.vmem_to_hbm [thread:$0]  %s2800, 256, %s2797, %s2777
        $region76: #{autoencoder_forward_seq.1} parent=51 // pred_fallthru
          _
        // Predicated region
        $region77: #{autoencoder_forward_seq.1} parent=51 // pred_check
          %p2803 = pneg %p273
        $region78: #{autoencoder_forward_seq.1} parent=51 // pred_check_branch
          %2805 = sbr.rel (%p2803) target = $region80
        $region79: #{autoencoder_forward_seq.1} parent=51 // pred_region
          %s2807 = ssub.s32 256, 256
          %2808 = vsyncadd %s2782, %s2807
          %s2809 = smul.addr %s30, 2
          %s2810 = smul.addr %s2809, 128
          %s2811 = scalar_lea.hbm %s10, %s2810
          %s2813 = sshll.u32 %s2785, 4
          %s2814 = int_to_ptr.vmem [resolvable:$true] %s2813
          %2816 = dma.vmem_to_hbm [thread:$0]  %s2814, 256, %s2811, %s2782
        $region80: #{autoencoder_forward_seq.1} parent=51 // pred_fallthru
          _
      $region52: #{autoencoder_forward_seq.1} parent=5 // pred_fallthru
        _
      %p2817 = scmp.le.s32.totalorder 2, %s25
      // Predicated region
      $region81: #{autoencoder_forward_seq.1} parent=5 // pred_check
        %p2818 = pneg %p2817
      $region82: #{autoencoder_forward_seq.1} parent=5 // pred_check_branch
        %2820 = sbr.rel (%p2818) target = $region84
      $region83: #{autoencoder_forward_seq.1} parent=5 // pred_region
        %s2821 = ssub.s32 %s25, 2
        // Predicated region
        $region85: #{autoencoder_forward_seq.1} parent=83 // pred_check
          %p2822 = pneg %p227
        $region86: #{autoencoder_forward_seq.1} parent=83 // pred_check_branch
          %2824 = sbr.rel (%p2822) target = $region88
        $region87: #{autoencoder_forward_seq.1} parent=83 // pred_region
          %p2825 = scmp.lt.s32.totalorder %s31, 3
          %s2826 = scalar_select %p2825, %s31, 3
          %s2827 = smul.addr %s2826, 8
          %s2828 = scalar_lea.vmem %s8, %s2827
        $region88: #{autoencoder_forward_seq.1} parent=83 // pred_fallthru
          _
        // Predicated region
        $region89: #{autoencoder_forward_seq.1} parent=83 // pred_check
          %p2829 = pneg %p253
        $region90: #{autoencoder_forward_seq.1} parent=83 // pred_check_branch
          %2831 = sbr.rel (%p2829) target = $region92
        $region91: #{autoencoder_forward_seq.1} parent=83 // pred_region
          %s2832 = sand.u32 %s238, 1
          %s2833 = scalar_lea.sflag [#allocation5], %s2832
          %s2834 = sand.u32 %s238, 1
          %s2835 = smul.addr %s2834, 16
          %s2836 = scalar_lea.vmem [#allocation9], %s2835
          %2837 = dma.done %s2833, 256
        $region92: #{autoencoder_forward_seq.1} parent=83 // pred_fallthru
          _
        // Predicated region
        $region93: #{autoencoder_forward_seq.1} parent=83 // pred_check
          %p2838 = pneg %p279
        $region94: #{autoencoder_forward_seq.1} parent=83 // pred_check_branch
          %2840 = sbr.rel (%p2838) target = $region96
        $region95: #{autoencoder_forward_seq.1} parent=83 // pred_region
          %s2841 = sand.u32 %s264, 1
          %s2842 = scalar_lea.sflag [#allocation11], %s2841
          %s2843 = sand.u32 %s264, 1
          %s2844 = smul.addr %s2843, 16
          %s2845 = scalar_lea.vmem [#allocation10], %s2844
          %2846 = dma.done %s2842, 256
        $region96: #{autoencoder_forward_seq.1} parent=83 // pred_fallthru
          _
      $region84: #{autoencoder_forward_seq.1} parent=5 // pred_fallthru
        _
    $region6: #{autoencoder_forward_seq.1} parent=1 // loop_footer
      %s29 = sadd.s32 1, %s25
    $region7: #{autoencoder_forward_seq.1} parent=1 // loop_footer_branch
      %24 = sbr.rel target = $region3
    $region8: #{autoencoder_forward_seq.1} parent=1 // loop_exit
      _
    %2847 = vsyncpa [#allocation4], 1
    %s2848 = scalar_lea.sflag [#allocation4], 1
    %2849 = vsyncpa %s2848, 1
    %2850 = vsyncpa [#allocation7], 1
    %2851 = vsyncpa [#allocation5], 1
    %s2852 = scalar_lea.sflag [#allocation5], 1
    %2853 = vsyncpa %s2852, 1
    %2854 = vsyncpa [#allocation11], 1
    %s2855 = scalar_lea.sflag [#allocation11], 1
    %2856 = vsyncpa %s2855, 1

</llo_original>
